<compile_context>
chip_gen: v6e
topology: v6e:2x2x1
jax: 0.10.0
libtpu: 0.0.40
codegen_flags: <defaults>
</compile_context>

<pallas_src>
import functools

import jax
import jax.numpy as jnp
from jax import lax
from jax.experimental import pallas as pl
from jax.experimental.pallas import tpu as pltpu

_INV_SQRT2 = 0.7071067811865476


def _round_up(x, m):
    return (x + m - 1) // m * m


def _vmem_budget_bytes():
    """Per-TensorCore VMEM request with headroom (v5e/v6e: 128 MiB, v7x: 64 MiB)."""
    cap = 64 * 1024 * 1024  # conservative default if query fails (v7x per-TC)
    try:
        info = pltpu.get_tpu_info()
        cap = int(getattr(info, "vmem_capacity_bytes", cap))
    except Exception:
        pass
    # ~25% headroom for compiler-internal scratch / pipeline bookkeeping.
    return min(cap * 3 // 4, 100 * 1024 * 1024)


def _choose_tile_f(out_feats, in_feats, w_bytes, budget):
    """Largest F tile (<=512, multiple of 128) that divides the padded F dim
    and whose (worst-case double-buffered) weight tile stays within budget."""
    f_total = _round_up(out_feats, 128)
    for cand in (512, 384, 256, 128):
        if f_total % cand == 0 and 2 * in_feats * cand * w_bytes <= budget // 2:
            return f_total, cand
    return f_total, 128


def _const_spec(shape, index_map, single_buffer):
    """BlockSpec for operands whose block only changes on the slow F axis."""
    if single_buffer and hasattr(pl, "Buffered"):
        return pl.BlockSpec(shape, index_map, pipeline_mode=pl.Buffered(1))
    return pl.BlockSpec(shape, index_map)


def _fcblock_kernel(x_ref, w_ref, par_ref, o_ref,
                    sum_ref, sumsq_ref, scale_ref, shift_ref,
                    *, n_real, tile_m, eps):
    p = pl.program_id(1)   # 0 = batch-statistics pass, 1 = normalize + GELU pass
    t = pl.program_id(2)   # batch tile index

    # Linear (bias omitted: it cancels exactly under BatchNorm's mean
    # subtraction).  MXU matmul in the input dtype with f32 accumulation.
    y = jnp.dot(x_ref[...], w_ref[...], preferred_element_type=jnp.float32)

    @pl.when(p == 0)
    def _stats_pass():
        @pl.when(t == 0)
        def _init():
            sum_ref[...] = jnp.zeros_like(sum_ref)
            sumsq_ref[...] = jnp.zeros_like(sumsq_ref)

        # Mask rows that are ragged-last-tile padding (their y is garbage and
        # must not contaminate the batch statistics).  jnp.where is a select,
        # so NaN/Inf garbage cannot leak through.
        rows = t * tile_m + lax.broadcasted_iota(jnp.int32, y.shape, 0)
        ym = jnp.where(rows < n_real, y, 0.0)
        sum_ref[...] += jnp.sum(ym, axis=0, keepdims=True)
        sumsq_ref[...] += jnp.sum(ym * ym, axis=0, keepdims=True)

    @pl.when(p == 1)
    def _normalize_pass():
        @pl.when(t == 0)
        def _finalize_stats():
            inv_n = jnp.float32(1.0 / n_real)
            mean = sum_ref[...] * inv_n
            # Biased variance via E[y^2] - E[y]^2, clamped against cancellation
            # (bias already removed from y, which keeps |mean| small).
            var = jnp.maximum(sumsq_ref[...] * inv_n - mean * mean, 0.0)
            gamma = par_ref[0:1, :].astype(jnp.float32)
            beta = par_ref[1:2, :].astype(jnp.float32)
            scale = gamma * lax.rsqrt(var + eps)
            scale_ref[...] = scale
            shift_ref[...] = beta - mean * scale

        # Fused BN affine: one multiply + one add per element.
        z = y * scale_ref[...] + shift_ref[...]
        # Exact (erf-based) GELU — PyTorch default approximate='none'.
        out = 0.5 * z * (1.0 + lax.erf(z * _INV_SQRT2))
        o_ref[...] = out.astype(o_ref.dtype)


def fcblock_forward(x, w, b, gamma, beta, *, tile_m=None, tile_f=None, eps=1e-5):
    """x: (N, in_feats); w: (in_feats, out_feats); b/gamma/beta: (out_feats,).

    Note: `b` is accepted for API fidelity but is mathematically cancelled by
    BatchNorm's mean subtraction, so it is not passed to the kernel.
    """
    n, in_feats = x.shape
    assert w.shape[0] == in_feats
    out_feats = w.shape[1]
    assert b.shape == (out_feats,)

    budget = _vmem_budget_bytes()
    x_bytes = x.dtype.itemsize
    w_bytes = w.dtype.itemsize

    # --- F tiling (lane-dense, multiple of 128; bounded weight residency). ---
    if tile_f is None:
        f_total, tile_f = _choose_tile_f(out_feats, in_feats, w_bytes, budget)
    else:
        tile_f = max(128, _round_up(int(tile_f), 128))
        f_total = _round_up(out_feats, tile_f)
    nf = f_total // tile_f

    # --- batch tiling derived from the VMEM budget. ---
    sub = {4: 8, 2: 16, 1: 32}.get(x_bytes, 8)   # sublane multiple per dtype
    if tile_m is None:
        fixed = (2 * in_feats * tile_f * w_bytes   # W tile (worst case 2 bufs)
                 + 2 * 8 * tile_f * 4              # gamma/beta slab
                 + 4 * 8 * tile_f * 4)             # stats/scale/shift scratch
        per_row = 2 * x_bytes * (in_feats + tile_f)  # double-buffered x + out
        tile_m = max(sub, (budget - fixed) // per_row)
    tile_m = int(min(int(tile_m), 2048, _round_up(n, sub)))
    tile_m = max(sub, tile_m // sub * sub)
    nm = pl.cdiv(n, tile_m)

    # --- small parameter padding along F only (x is fed unpadded). ---
    wp = w if f_total == out_feats else jnp.pad(w, ((0, 0), (0, f_total - out_feats)))
    params = jnp.zeros((8, f_total), jnp.float32)
    params = params.at[0, :out_feats].set(gamma.astype(jnp.float32))
    params = params.at[1, :out_feats].set(beta.astype(jnp.float32))

    kernel = functools.partial(_fcblock_kernel, n_real=n, tile_m=tile_m, eps=eps)

    def _run(single_buffer):
        in_specs = [
            # x tiles over the batch; re-fetched once per pass of each F tile.
            pl.BlockSpec((tile_m, in_feats), lambda f, p, t: (t, 0)),
            # Weight F-tile: block only changes on the slow (outer) F axis.
            _const_spec((in_feats, tile_f), lambda f, p, t: (0, f), single_buffer),
            # gamma/beta slab (rows 0/1); same residency behaviour as W.
            _const_spec((8, tile_f), lambda f, p, t: (0, f), single_buffer),
        ]
        # Pass 0 (p==0) writes nothing; mapping every pass-0 step to block
        # (0, f) means that block is only written back to HBM after pass-1
        # t==0 has fully overwritten it (out index changes at t==1), so no
        # garbage ever reaches HBM.
        out_specs = pl.BlockSpec((tile_m, tile_f), lambda f, p, t: (p * t, f))
        return pl.pallas_call(
            kernel,
            out_shape=jax.ShapeDtypeStruct((n, f_total), x.dtype),
            grid_spec=pltpu.PrefetchScalarGridSpec(
                num_scalar_prefetch=0,
                grid=(nf, 2, nm),   # (F tile, pass, batch tile)
                in_specs=in_specs,
                out_specs=out_specs,
                scratch_shapes=[
                    pltpu.VMEM((1, tile_f), jnp.float32),   # per-feature sum
                    pltpu.VMEM((1, tile_f), jnp.float32),   # per-feature sum sq
                    pltpu.VMEM((1, tile_f), jnp.float32),   # fused BN scale
                    pltpu.VMEM((1, tile_f), jnp.float32),   # fused BN shift
                ],
            ),
            compiler_params=pltpu.CompilerParams(
                # F tiles are fully independent -> parallel (v7x dual-TC);
                # pass / batch-tile axes carry scratch state -> arbitrary.
                dimension_semantics=("parallel", "arbitrary", "arbitrary"),
                vmem_limit_bytes=budget,
            ),
        )(x, wp, params)

    try:
        out = _run(single_buffer=True)
    except Exception:
        # pipeline_mode=pl.Buffered(1) unsupported on this jax/libtpu combo:
        # fall back to default double-buffering of the constant operands.
        out = _run(single_buffer=False)

    return out if f_total == out_feats else out[:, :out_feats]


def _reference(x, w, b, gamma, beta, eps=1e-5):
    y = x @ w + b
    mean = jnp.mean(y, axis=0, keepdims=True)
    var = jnp.mean((y - mean) ** 2, axis=0, keepdims=True)
    y_hat = (y - mean) / jnp.sqrt(var + eps)
    z = gamma * y_hat + beta
    return 0.5 * z * (1.0 + lax.erf(z * _INV_SQRT2))


if __name__ == "__main__":
    # Small shapes consistent with FCBlock(in_feats=32, out_feats=64).
    # batch=48 with tile_m=32 exercises multi-tile + ragged (masked) last tile.
    batch, in_feats, out_feats = 48, 32, 64

    key = jax.random.PRNGKey(0)
    kx, kw, kb = jax.random.split(key, 3)

    x = jax.random.normal(kx, (batch, in_feats), dtype=jnp.float32)

    # Deterministic parameter init mimicking PyTorch defaults:
    #   Linear weight/bias ~ U(-1/sqrt(in_feats), 1/sqrt(in_feats))
    #   BatchNorm1d: gamma = 1, beta = 0
    bound = 1.0 / jnp.sqrt(jnp.float32(in_feats))
    w = jax.random.uniform(kw, (in_feats, out_feats), jnp.float32, -bound, bound)
    b = jax.random.uniform(kb, (out_feats,), jnp.float32, -bound, bound)
    gamma = jnp.ones((out_feats,), jnp.float32)
    beta = jnp.zeros((out_feats,), jnp.float32)

    out = fcblock_forward(x, w, b, gamma, beta, tile_m=32)
    out = jax.block_until_ready(out)

    ref = _reference(x, w, b, gamma, beta)
    assert out.shape == (batch, out_feats)
    err = float(jnp.max(jnp.abs(out - ref)))
    assert jnp.allclose(out, ref, atol=1e-4, rtol=1e-4), (
        "mismatch vs reference, max abs err = %g" % err)

    print("KERNEL_OK")
</pallas_src>

<mosaic_0001>
module attributes {stable_mosaic.version = 11 : i64} {
  func.func @_fcblock_kernel(%arg0: i32, %arg1: i32, %arg2: i32, %arg3: memref<32x32xf32, #tpu.memory_space<vmem>>, %arg4: memref<32x128xf32, #tpu.memory_space<vmem>>, %arg5: memref<8x128xf32, #tpu.memory_space<vmem>>, %arg6: memref<32x128xf32, #tpu.memory_space<vmem>>, %arg7: memref<1x128xf32, #tpu.memory_space<vmem>>, %arg8: memref<1x128xf32, #tpu.memory_space<vmem>>, %arg9: memref<1x128xf32, #tpu.memory_space<vmem>>, %arg10: memref<1x128xf32, #tpu.memory_space<vmem>>) attributes {dimension_semantics = [#tpu.dimension_semantics<parallel>, #tpu.dimension_semantics<arbitrary>, #tpu.dimension_semantics<arbitrary>], iteration_bounds = array<i64: 1, 2, 2>, scalar_prefetch = 0 : i64, scratch_operands = 4 : i64, tpu.core_type = #tpu.core_type<tc>, window_params = [{transform_indices = @transform_0, window_bounds = array<i64: 32, 32>}, {pipeline_mode = #tpu.pipeline_mode<synchronous>, transform_indices = @transform_1, window_bounds = array<i64: 32, 128>}, {pipeline_mode = #tpu.pipeline_mode<synchronous>, transform_indices = @transform_2, window_bounds = array<i64: 8, 128>}, {transform_indices = @transform_3, window_bounds = array<i64: 32, 128>}]} {
    %c0 = arith.constant 0 : index
    %c0_0 = arith.constant 0 : index
    %0 = vector.load %arg3[%c0, %c0_0] : memref<32x32xf32, #tpu.memory_space<vmem>>, vector<32x32xf32>
    %c0_1 = arith.constant 0 : index
    %c0_2 = arith.constant 0 : index
    %1 = vector.load %arg4[%c0_1, %c0_2] : memref<32x128xf32, #tpu.memory_space<vmem>>, vector<32x128xf32>
    %cst = arith.constant dense<0.000000e+00> : vector<32x128xf32>
    %2 = tpu.matmul %0, %1, %cst {dimension_numbers = #tpu.dot_dimension_numbers<[1], [0], [0], [1], [0, 0, 1, 1], [], []>} : vector<32x32xf32>, vector<32x128xf32>, vector<32x128xf32> -> vector<32x128xf32>
    %c0_i32 = arith.constant 0 : i32
    %3 = arith.cmpi eq, %arg1, %c0_i32 : i32
    %4 = arith.extui %3 : i1 to i32
    %c0_i32_3 = arith.constant 0 : i32
    %5 = arith.cmpi ne, %4, %c0_i32_3 : i32
    scf.if %5 {
      %c0_i32_5 = arith.constant 0 : i32
      %9 = arith.cmpi eq, %arg2, %c0_i32_5 : i32
      %10 = arith.extui %9 : i1 to i32
      %c0_i32_6 = arith.constant 0 : i32
      %11 = arith.cmpi ne, %10, %c0_i32_6 : i32
      scf.if %11 {
        %cst_18 = arith.constant 0.000000e+00 : f32
        %31 = vector.broadcast %cst_18 : f32 to vector<1x128xf32>
        %c0_19 = arith.constant 0 : index
        %c0_20 = arith.constant 0 : index
        %32 = vector.load %arg7[%c0_19, %c0_20] : memref<1x128xf32, #tpu.memory_space<vmem>>, vector<1x128xf32>
        tpu.vector_store %arg7[%c0_19, %c0_20], %31 {strides = array<i32>} : memref<1x128xf32, #tpu.memory_space<vmem>>, vector<1x128xf32>,
        %cst_21 = arith.constant 0.000000e+00 : f32
        %33 = vector.broadcast %cst_21 : f32 to vector<1x128xf32>
        %c0_22 = arith.constant 0 : index
        %c0_23 = arith.constant 0 : index
        %34 = vector.load %arg8[%c0_22, %c0_23] : memref<1x128xf32, #tpu.memory_space<vmem>>, vector<1x128xf32>
        tpu.vector_store %arg8[%c0_22, %c0_23], %33 {strides = array<i32>} : memref<1x128xf32, #tpu.memory_space<vmem>>, vector<1x128xf32>,
      } else {
      }
      %c32_i32 = arith.constant 32 : i32
      %12 = arith.muli %arg2, %c32_i32 : i32
      %13 = tpu.iota {dimensions = array<i32: 0>} : vector<32x128xi32>
      %14 = vector.broadcast %12 : i32 to vector<32x128xi32>
      %15 = arith.addi %14, %13 : vector<32x128xi32>
      %c48_i32 = arith.constant 48 : i32
      %16 = vector.broadcast %c48_i32 : i32 to vector<32x128xi32>
      %17 = arith.cmpi slt, %15, %16 : vector<32x128xi32>
      %cst_7 = arith.constant 0.000000e+00 : f32
      %18 = vector.broadcast %cst_7 : f32 to vector<32x128xf32>
      %19 = arith.select %17, %2, %18 : vector<32x128xi1>, vector<32x128xf32>
      %c0_8 = arith.constant 0 : index
      %c0_9 = arith.constant 0 : index
      %20 = vector.load %arg7[%c0_8, %c0_9] : memref<1x128xf32, #tpu.memory_space<vmem>>, vector<1x128xf32>
      %cst_10 = arith.constant dense<0.000000e+00> : vector<128xf32>
      %21 = vector.multi_reduction <add>, %19, %cst_10 [0] : vector<32x128xf32> to vector<128xf32>
      %22 = vector.shape_cast %21 : vector<128xf32> to vector<1x128xf32>
      %23 = arith.addf %20, %22 : vector<1x128xf32>
      %c0_11 = arith.constant 0 : index
      %c0_12 = arith.constant 0 : index
      %24 = vector.load %arg7[%c0_11, %c0_12] : memref<1x128xf32, #tpu.memory_space<vmem>>, vector<1x128xf32>
      tpu.vector_store %arg7[%c0_11, %c0_12], %23 {strides = array<i32>} : memref<1x128xf32, #tpu.memory_space<vmem>>, vector<1x128xf32>,
      %c0_13 = arith.constant 0 : index
      %c0_14 = arith.constant 0 : index
      %25 = vector.load %arg8[%c0_13, %c0_14] : memref<1x128xf32, #tpu.memory_space<vmem>>, vector<1x128xf32>
      %26 = arith.mulf %19, %19 : vector<32x128xf32>
      %cst_15 = arith.constant dense<0.000000e+00> : vector<128xf32>
      %27 = vector.multi_reduction <add>, %26, %cst_15 [0] : vector<32x128xf32> to vector<128xf32>
      %28 = vector.shape_cast %27 : vector<128xf32> to vector<1x128xf32>
      %29 = arith.addf %25, %28 : vector<1x128xf32>
      %c0_16 = arith.constant 0 : index
      %c0_17 = arith.constant 0 : index
      %30 = vector.load %arg8[%c0_16, %c0_17] : memref<1x128xf32, #tpu.memory_space<vmem>>, vector<1x128xf32>
      tpu.vector_store %arg8[%c0_16, %c0_17], %29 {strides = array<i32>} : memref<1x128xf32, #tpu.memory_space<vmem>>, vector<1x128xf32>,
    } else {
    }
    %c1_i32 = arith.constant 1 : i32
    %6 = arith.cmpi eq, %arg1, %c1_i32 : i32
    %7 = arith.extui %6 : i1 to i32
    %c0_i32_4 = arith.constant 0 : i32
    %8 = arith.cmpi ne, %7, %c0_i32_4 : i32
    scf.if %8 {
      %c0_i32_5 = arith.constant 0 : i32
      %9 = arith.cmpi eq, %arg2, %c0_i32_5 : i32
      %10 = arith.extui %9 : i1 to i32
      %c0_i32_6 = arith.constant 0 : i32
      %11 = arith.cmpi ne, %10, %c0_i32_6 : i32
      scf.if %11 {
        %c0_16 = arith.constant 0 : index
        %c0_17 = arith.constant 0 : index
        %27 = vector.load %arg7[%c0_16, %c0_17] : memref<1x128xf32, #tpu.memory_space<vmem>>, vector<1x128xf32>
        %cst_18 = arith.constant 0.020833334 : f32
        %28 = vector.broadcast %cst_18 : f32 to vector<1x128xf32>
        %29 = arith.mulf %27, %28 : vector<1x128xf32>
        %c0_19 = arith.constant 0 : index
        %c0_20 = arith.constant 0 : index
        %30 = vector.load %arg8[%c0_19, %c0_20] : memref<1x128xf32, #tpu.memory_space<vmem>>, vector<1x128xf32>
        %cst_21 = arith.constant 0.020833334 : f32
        %31 = vector.broadcast %cst_21 : f32 to vector<1x128xf32>
        %32 = arith.mulf %30, %31 : vector<1x128xf32>
        %33 = arith.mulf %29, %29 : vector<1x128xf32>
        %34 = arith.subf %32, %33 : vector<1x128xf32>
        %cst_22 = arith.constant 0.000000e+00 : f32
        %35 = vector.broadcast %cst_22 : f32 to vector<1x128xf32>
        %36 = arith.maximumf %34, %35 : vector<1x128xf32>
        %c0_23 = arith.constant 0 : index
        %c0_24 = arith.constant 0 : index
        %37 = vector.load %arg5[%c0_23, %c0_24] : memref<8x128xf32, #tpu.memory_space<vmem>>, vector<1x128xf32>
        %c1 = arith.constant 1 : index
        %c0_25 = arith.constant 0 : index
        %38 = vector.load %arg5[%c1, %c0_25] : memref<8x128xf32, #tpu.memory_space<vmem>>, vector<1x128xf32>
        %cst_26 = arith.constant 9.99999974E-6 : f32
        %39 = vector.broadcast %cst_26 : f32 to vector<1x128xf32>
        %40 = arith.addf %36, %39 : vector<1x128xf32>
        %41 = math.rsqrt %40 : vector<1x128xf32>
        %42 = arith.mulf %37, %41 : vector<1x128xf32>
        %c0_27 = arith.constant 0 : index
        %c0_28 = arith.constant 0 : index
        %43 = vector.load %arg9[%c0_27, %c0_28] : memref<1x128xf32, #tpu.memory_space<vmem>>, vector<1x128xf32>
        tpu.vector_store %arg9[%c0_27, %c0_28], %42 {strides = array<i32>} : memref<1x128xf32, #tpu.memory_space<vmem>>, vector<1x128xf32>,
        %44 = arith.mulf %29, %42 : vector<1x128xf32>
        %45 = arith.subf %38, %44 : vector<1x128xf32>
        %c0_29 = arith.constant 0 : index
        %c0_30 = arith.constant 0 : index
        %46 = vector.load %arg10[%c0_29, %c0_30] : memref<1x128xf32, #tpu.memory_space<vmem>>, vector<1x128xf32>
        tpu.vector_store %arg10[%c0_29, %c0_30], %45 {strides = array<i32>} : memref<1x128xf32, #tpu.memory_space<vmem>>, vector<1x128xf32>,
      } else {
      }
      %c0_7 = arith.constant 0 : index
      %c0_8 = arith.constant 0 : index
      %12 = vector.load %arg9[%c0_7, %c0_8] : memref<1x128xf32, #tpu.memory_space<vmem>>, vector<1x128xf32>
      %13 = vector.broadcast %12 : vector<1x128xf32> to vector<32x128xf32>
      %14 = arith.mulf %2, %13 : vector<32x128xf32>
      %c0_9 = arith.constant 0 : index
      %c0_10 = arith.constant 0 : index
      %15 = vector.load %arg10[%c0_9, %c0_10] : memref<1x128xf32, #tpu.memory_space<vmem>>, vector<1x128xf32>
      %16 = vector.broadcast %15 : vector<1x128xf32> to vector<32x128xf32>
      %17 = arith.addf %14, %16 : vector<32x128xf32>
      %cst_11 = arith.constant 5.000000e-01 : f32
      %18 = vector.broadcast %cst_11 : f32 to vector<32x128xf32>
      %19 = arith.mulf %18, %17 : vector<32x128xf32>
      %cst_12 = arith.constant 0.707106769 : f32
      %20 = vector.broadcast %cst_12 : f32 to vector<32x128xf32>
      %21 = arith.mulf %17, %20 : vector<32x128xf32>
      %22 = math.erf %21 : vector<32x128xf32>
      %cst_13 = arith.constant 1.000000e+00 : f32
      %23 = vector.broadcast %cst_13 : f32 to vector<32x128xf32>
      %24 = arith.addf %23, %22 : vector<32x128xf32>
      %25 = arith.mulf %19, %24 : vector<32x128xf32>
      %c0_14 = arith.constant 0 : index
      %c0_15 = arith.constant 0 : index
      %26 = vector.load %arg6[%c0_14, %c0_15] : memref<32x128xf32, #tpu.memory_space<vmem>>, vector<32x128xf32>
      tpu.vector_store %arg6[%c0_14, %c0_15], %25 {strides = array<i32>} : memref<32x128xf32, #tpu.memory_space<vmem>>, vector<32x128xf32>,
    } else {
    }
    return
  }
  func.func @transform_0(%arg0: i32, %arg1: i32, %arg2: i32) -> (i32, i32) {
    %c0_i32 = arith.constant 0 : i32
    %c0_i32_0 = arith.constant 0 : i32
    return %arg2, %c0_i32 : i32, i32
  }
  func.func @transform_1(%arg0: i32, %arg1: i32, %arg2: i32) -> (i32, i32) {
    %c0_i32 = arith.constant 0 : i32
    %c0_i32_0 = arith.constant 0 : i32
    return %c0_i32, %arg0 : i32, i32
  }
  func.func @transform_2(%arg0: i32, %arg1: i32, %arg2: i32) -> (i32, i32) {
    %c0_i32 = arith.constant 0 : i32
    %c0_i32_0 = arith.constant 0 : i32
    return %c0_i32, %arg0 : i32, i32
  }
  func.func @transform_3(%arg0: i32, %arg1: i32, %arg2: i32) -> (i32, i32) {
    %0 = arith.muli %arg1, %arg2 : i32
    %c0_i32 = arith.constant 0 : i32
    return %0, %arg0 : i32, i32
  }
}

module attributes {stable_mosaic.version = 11 : i64} {
  func.func @_fcblock_kernel(%arg0: i32, %arg1: i32, %arg2: i32, %arg3: memref<32x32xf32, #tpu.memory_space<vmem>>, %arg4: memref<32x128xf32, #tpu.memory_space<vmem>>, %arg5: memref<8x128xf32, #tpu.memory_space<vmem>>, %arg6: memref<32x128xf32, #tpu.memory_space<vmem>>, %arg7: memref<1x128xf32, #tpu.memory_space<vmem>>, %arg8: memref<1x128xf32, #tpu.memory_space<vmem>>, %arg9: memref<1x128xf32, #tpu.memory_space<vmem>>, %arg10: memref<1x128xf32, #tpu.memory_space<vmem>>) attributes {dimension_semantics = [#tpu.dimension_semantics<parallel>, #tpu.dimension_semantics<arbitrary>, #tpu.dimension_semantics<arbitrary>], iteration_bounds = array<i64: 1, 2, 2>, scalar_prefetch = 0 : i64, scratch_operands = 4 : i64, tpu.core_type = #tpu.core_type<tc>, window_params = [{transform_indices = @transform_0, window_bounds = array<i64: 32, 32>}, {transform_indices = @transform_1, window_bounds = array<i64: 32, 128>}, {transform_indices = @transform_2, window_bounds = array<i64: 8, 128>}, {transform_indices = @transform_3, window_bounds = array<i64: 32, 128>}]} {
    %c0 = arith.constant 0 : index
    %c0_0 = arith.constant 0 : index
    %0 = vector.load %arg3[%c0, %c0_0] : memref<32x32xf32, #tpu.memory_space<vmem>>, vector<32x32xf32>
    %c0_1 = arith.constant 0 : index
    %c0_2 = arith.constant 0 : index
    %1 = vector.load %arg4[%c0_1, %c0_2] : memref<32x128xf32, #tpu.memory_space<vmem>>, vector<32x128xf32>
    %cst = arith.constant dense<0.000000e+00> : vector<32x128xf32>
    %2 = tpu.matmul %0, %1, %cst {dimension_numbers = #tpu.dot_dimension_numbers<[1], [0], [0], [1], [0, 0, 1, 1], [], []>} : vector<32x32xf32>, vector<32x128xf32>, vector<32x128xf32> -> vector<32x128xf32>
    %c0_i32 = arith.constant 0 : i32
    %3 = arith.cmpi eq, %arg1, %c0_i32 : i32
    %4 = arith.extui %3 : i1 to i32
    %c0_i32_3 = arith.constant 0 : i32
    %5 = arith.cmpi ne, %4, %c0_i32_3 : i32
    scf.if %5 {
      %c0_i32_5 = arith.constant 0 : i32
      %9 = arith.cmpi eq, %arg2, %c0_i32_5 : i32
      %10 = arith.extui %9 : i1 to i32
      %c0_i32_6 = arith.constant 0 : i32
      %11 = arith.cmpi ne, %10, %c0_i32_6 : i32
      scf.if %11 {
        %cst_18 = arith.constant 0.000000e+00 : f32
        %31 = vector.broadcast %cst_18 : f32 to vector<1x128xf32>
        %c0_19 = arith.constant 0 : index
        %c0_20 = arith.constant 0 : index
        %32 = vector.load %arg7[%c0_19, %c0_20] : memref<1x128xf32, #tpu.memory_space<vmem>>, vector<1x128xf32>
        tpu.vector_store %arg7[%c0_19, %c0_20], %31 {strides = array<i32>} : memref<1x128xf32, #tpu.memory_space<vmem>>, vector<1x128xf32>,
        %cst_21 = arith.constant 0.000000e+00 : f32
        %33 = vector.broadcast %cst_21 : f32 to vector<1x128xf32>
        %c0_22 = arith.constant 0 : index
        %c0_23 = arith.constant 0 : index
        %34 = vector.load %arg8[%c0_22, %c0_23] : memref<1x128xf32, #tpu.memory_space<vmem>>, vector<1x128xf32>
        tpu.vector_store %arg8[%c0_22, %c0_23], %33 {strides = array<i32>} : memref<1x128xf32, #tpu.memory_space<vmem>>, vector<1x128xf32>,
      } else {
      }
      %c32_i32 = arith.constant 32 : i32
      %12 = arith.muli %arg2, %c32_i32 : i32
      %13 = tpu.iota {dimensions = array<i32: 0>} : vector<32x128xi32>
      %14 = vector.broadcast %12 : i32 to vector<32x128xi32>
      %15 = arith.addi %14, %13 : vector<32x128xi32>
      %c48_i32 = arith.constant 48 : i32
      %16 = vector.broadcast %c48_i32 : i32 to vector<32x128xi32>
      %17 = arith.cmpi slt, %15, %16 : vector<32x128xi32>
      %cst_7 = arith.constant 0.000000e+00 : f32
      %18 = vector.broadcast %cst_7 : f32 to vector<32x128xf32>
      %19 = arith.select %17, %2, %18 : vector<32x128xi1>, vector<32x128xf32>
      %c0_8 = arith.constant 0 : index
      %c0_9 = arith.constant 0 : index
      %20 = vector.load %arg7[%c0_8, %c0_9] : memref<1x128xf32, #tpu.memory_space<vmem>>, vector<1x128xf32>
      %cst_10 = arith.constant dense<0.000000e+00> : vector<128xf32>
      %21 = vector.multi_reduction <add>, %19, %cst_10 [0] : vector<32x128xf32> to vector<128xf32>
      %22 = vector.shape_cast %21 : vector<128xf32> to vector<1x128xf32>
      %23 = arith.addf %20, %22 : vector<1x128xf32>
      %c0_11 = arith.constant 0 : index
      %c0_12 = arith.constant 0 : index
      %24 = vector.load %arg7[%c0_11, %c0_12] : memref<1x128xf32, #tpu.memory_space<vmem>>, vector<1x128xf32>
      tpu.vector_store %arg7[%c0_11, %c0_12], %23 {strides = array<i32>} : memref<1x128xf32, #tpu.memory_space<vmem>>, vector<1x128xf32>,
      %c0_13 = arith.constant 0 : index
      %c0_14 = arith.constant 0 : index
      %25 = vector.load %arg8[%c0_13, %c0_14] : memref<1x128xf32, #tpu.memory_space<vmem>>, vector<1x128xf32>
      %26 = arith.mulf %19, %19 : vector<32x128xf32>
      %cst_15 = arith.constant dense<0.000000e+00> : vector<128xf32>
      %27 = vector.multi_reduction <add>, %26, %cst_15 [0] : vector<32x128xf32> to vector<128xf32>
      %28 = vector.shape_cast %27 : vector<128xf32> to vector<1x128xf32>
      %29 = arith.addf %25, %28 : vector<1x128xf32>
      %c0_16 = arith.constant 0 : index
      %c0_17 = arith.constant 0 : index
      %30 = vector.load %arg8[%c0_16, %c0_17] : memref<1x128xf32, #tpu.memory_space<vmem>>, vector<1x128xf32>
      tpu.vector_store %arg8[%c0_16, %c0_17], %29 {strides = array<i32>} : memref<1x128xf32, #tpu.memory_space<vmem>>, vector<1x128xf32>,
    } else {
    }
    %c1_i32 = arith.constant 1 : i32
    %6 = arith.cmpi eq, %arg1, %c1_i32 : i32
    %7 = arith.extui %6 : i1 to i32
    %c0_i32_4 = arith.constant 0 : i32
    %8 = arith.cmpi ne, %7, %c0_i32_4 : i32
    scf.if %8 {
      %c0_i32_5 = arith.constant 0 : i32
      %9 = arith.cmpi eq, %arg2, %c0_i32_5 : i32
      %10 = arith.extui %9 : i1 to i32
      %c0_i32_6 = arith.constant 0 : i32
      %11 = arith.cmpi ne, %10, %c0_i32_6 : i32
      scf.if %11 {
        %c0_16 = arith.constant 0 : index
        %c0_17 = arith.constant 0 : index
        %27 = vector.load %arg7[%c0_16, %c0_17] : memref<1x128xf32, #tpu.memory_space<vmem>>, vector<1x128xf32>
        %cst_18 = arith.constant 0.020833334 : f32
        %28 = vector.broadcast %cst_18 : f32 to vector<1x128xf32>
        %29 = arith.mulf %27, %28 : vector<1x128xf32>
        %c0_19 = arith.constant 0 : index
        %c0_20 = arith.constant 0 : index
        %30 = vector.load %arg8[%c0_19, %c0_20] : memref<1x128xf32, #tpu.memory_space<vmem>>, vector<1x128xf32>
        %cst_21 = arith.constant 0.020833334 : f32
        %31 = vector.broadcast %cst_21 : f32 to vector<1x128xf32>
        %32 = arith.mulf %30, %31 : vector<1x128xf32>
        %33 = arith.mulf %29, %29 : vector<1x128xf32>
        %34 = arith.subf %32, %33 : vector<1x128xf32>
        %cst_22 = arith.constant 0.000000e+00 : f32
        %35 = vector.broadcast %cst_22 : f32 to vector<1x128xf32>
        %36 = arith.maximumf %34, %35 : vector<1x128xf32>
        %c0_23 = arith.constant 0 : index
        %c0_24 = arith.constant 0 : index
        %37 = vector.load %arg5[%c0_23, %c0_24] : memref<8x128xf32, #tpu.memory_space<vmem>>, vector<1x128xf32>
        %c1 = arith.constant 1 : index
        %c0_25 = arith.constant 0 : index
        %38 = vector.load %arg5[%c1, %c0_25] : memref<8x128xf32, #tpu.memory_space<vmem>>, vector<1x128xf32>
        %cst_26 = arith.constant 9.99999974E-6 : f32
        %39 = vector.broadcast %cst_26 : f32 to vector<1x128xf32>
        %40 = arith.addf %36, %39 : vector<1x128xf32>
        %41 = math.rsqrt %40 : vector<1x128xf32>
        %42 = arith.mulf %37, %41 : vector<1x128xf32>
        %c0_27 = arith.constant 0 : index
        %c0_28 = arith.constant 0 : index
        %43 = vector.load %arg9[%c0_27, %c0_28] : memref<1x128xf32, #tpu.memory_space<vmem>>, vector<1x128xf32>
        tpu.vector_store %arg9[%c0_27, %c0_28], %42 {strides = array<i32>} : memref<1x128xf32, #tpu.memory_space<vmem>>, vector<1x128xf32>,
        %44 = arith.mulf %29, %42 : vector<1x128xf32>
        %45 = arith.subf %38, %44 : vector<1x128xf32>
        %c0_29 = arith.constant 0 : index
        %c0_30 = arith.constant 0 : index
        %46 = vector.load %arg10[%c0_29, %c0_30] : memref<1x128xf32, #tpu.memory_space<vmem>>, vector<1x128xf32>
        tpu.vector_store %arg10[%c0_29, %c0_30], %45 {strides = array<i32>} : memref<1x128xf32, #tpu.memory_space<vmem>>, vector<1x128xf32>,
      } else {
      }
      %c0_7 = arith.constant 0 : index
      %c0_8 = arith.constant 0 : index
      %12 = vector.load %arg9[%c0_7, %c0_8] : memref<1x128xf32, #tpu.memory_space<vmem>>, vector<1x128xf32>
      %13 = vector.broadcast %12 : vector<1x128xf32> to vector<32x128xf32>
      %14 = arith.mulf %2, %13 : vector<32x128xf32>
      %c0_9 = arith.constant 0 : index
      %c0_10 = arith.constant 0 : index
      %15 = vector.load %arg10[%c0_9, %c0_10] : memref<1x128xf32, #tpu.memory_space<vmem>>, vector<1x128xf32>
      %16 = vector.broadcast %15 : vector<1x128xf32> to vector<32x128xf32>
      %17 = arith.addf %14, %16 : vector<32x128xf32>
      %cst_11 = arith.constant 5.000000e-01 : f32
      %18 = vector.broadcast %cst_11 : f32 to vector<32x128xf32>
      %19 = arith.mulf %18, %17 : vector<32x128xf32>
      %cst_12 = arith.constant 0.707106769 : f32
      %20 = vector.broadcast %cst_12 : f32 to vector<32x128xf32>
      %21 = arith.mulf %17, %20 : vector<32x128xf32>
      %22 = math.erf %21 : vector<32x128xf32>
      %cst_13 = arith.constant 1.000000e+00 : f32
      %23 = vector.broadcast %cst_13 : f32 to vector<32x128xf32>
      %24 = arith.addf %23, %22 : vector<32x128xf32>
      %25 = arith.mulf %19, %24 : vector<32x128xf32>
      %c0_14 = arith.constant 0 : index
      %c0_15 = arith.constant 0 : index
      %26 = vector.load %arg6[%c0_14, %c0_15] : memref<32x128xf32, #tpu.memory_space<vmem>>, vector<32x128xf32>
      tpu.vector_store %arg6[%c0_14, %c0_15], %25 {strides = array<i32>} : memref<32x128xf32, #tpu.memory_space<vmem>>, vector<32x128xf32>,
    } else {
    }
    return
  }
  func.func @transform_0(%arg0: i32, %arg1: i32, %arg2: i32) -> (i32, i32) {
    %c0_i32 = arith.constant 0 : i32
    %c0_i32_0 = arith.constant 0 : i32
    return %arg2, %c0_i32 : i32, i32
  }
  func.func @transform_1(%arg0: i32, %arg1: i32, %arg2: i32) -> (i32, i32) {
    %c0_i32 = arith.constant 0 : i32
    %c0_i32_0 = arith.constant 0 : i32
    return %c0_i32, %arg0 : i32, i32
  }
  func.func @transform_2(%arg0: i32, %arg1: i32, %arg2: i32) -> (i32, i32) {
    %c0_i32 = arith.constant 0 : i32
    %c0_i32_0 = arith.constant 0 : i32
    return %c0_i32, %arg0 : i32, i32
  }
  func.func @transform_3(%arg0: i32, %arg1: i32, %arg2: i32) -> (i32, i32) {
    %0 = arith.muli %arg1, %arg2 : i32
    %c0_i32 = arith.constant 0 : i32
    return %0, %arg0 : i32, i32
  }
}

</mosaic_0001>

<llo_original>
// kernel: tpu_custom_call.1
$region0: #{tpu_custom_call.1}
  #allocation0 [shape = 'u32[]', space=smem, size = 0x4, offset = 0x4, fixed_abs, tag = 'smem constant byte address 0x4 - core index']
  #allocation1 [shape = 'u32[144,128]{1,0:T(1,128)}', space=vmem, size = 0x12000, scoped, tag = 'internal scratch']
  #allocation2 [shape = 'f32[1,128]{1,0:T(1,128)}', space=vmem, size = 0x200, scoped, tag = 'scratch operand']
  #allocation3 [shape = 'f32[1,128]{1,0:T(1,128)}', space=vmem, size = 0x200, scoped, tag = 'scratch operand']
  #allocation4 [shape = 'f32[1,128]{1,0:T(1,128)}', space=vmem, size = 0x200, scoped, tag = 'scratch operand']
  #allocation5 [shape = 'f32[1,128]{1,0:T(1,128)}', space=vmem, size = 0x200, scoped, tag = 'scratch operand']
  %s0 = inlined_call_operand.vmem [shape: f32[48,32], index: 0, kind: input, shape index: {}]
  %s1 = inlined_call_operand.vmem [shape: f32[32,128], index: 1, kind: input, shape index: {}]
  %s2 = inlined_call_operand.vmem [shape: f32[8,128], index: 2, kind: input, shape index: {}]
  %s3 = inlined_call_operand.hbm [shape: f32[48,128], index: 3, kind: output, shape index: {}]
  %s4 = sld [smem:[#allocation0]]
  $region61: #{tpu_custom_call.1} parent=0
    _
  %s6 = ssub.s32 1, %s4
  %s7 = scalar_select 0, %s6, %s4
  $region1: #{tpu_custom_call.1} parent=0
    #allocation6 [shape = 'u8[32768]{0}', space=vmem, size = 0x8000, scoped, tag = 'output window, operand 0']
    #allocation7 [shape = 's32[2]{0}', space=sflag, size = 0x8, scoped, tag = 'scoped memory for tpu_custom_call.1']
    %8 = vsyncpa [#allocation7], 0
    %s9 = scalar_lea.sflag [#allocation7], 1
    %10 = vsyncpa %s9, 0
    loop: start=0, step=1, limit=6
    $region2: #{tpu_custom_call.1} parent=1 // loop_pre_header
      _
    $region3: #{tpu_custom_call.1} parent=1 // loop_header
      %s12 = sphi 0, %s16
      %p13 = scmp.ge.s32.totalorder %s12, 6
      %s19 = sphi 0, %s38
      %s20 = sphi 0, %s34
      %s21 = sphi 0, %s30
      %s22 = sphi 0, %s19
      %s23 = sphi 0, %s20
      %s24 = sphi 0, %s21
      %s25 = sphi 0, %s22
      %s26 = sphi 0, %s23
      %s27 = sphi 0, %s24
      %s41 = sphi 0, %s43
      %s44 = sphi 0, %s41
      %s45 = sphi 0, %s44
      %s61 = sphi 0, %s45
      %s67 = sphi 0, %s69
      %s70 = sphi 0, %s67
      %s71 = sphi 0, %s70
      %s87 = sphi 0, %s71
      %s93 = sphi 0, %s95
      %s96 = sphi 0, %s93
      %s97 = sphi 0, %s96
      %s113 = sphi 0, %s97
      %s123 = sphi 0, %s125
      %s126 = sphi 0, %s123
      %s127 = sphi 0, %s126
      %s143 = sphi 0, %s127
    $region4: #{tpu_custom_call.1} parent=1 // loop_header_branch
      %15 = sbr.rel (%p13) target = $region8
    $region5: #{tpu_custom_call.1} parent=1 // loop_body
      %s17 = ssub.s32 %s12, 1
      %s18 = ssub.s32 %s12, 2
      %s28 = sadd.s32 1, %s21
      %p29 = scmp.ge.s32.totalorder %s28, 2
      %s30 = scalar_select %p29, 0, %s28
      %s31 = sadd.s32 1, %s20
      %s32 = scalar_select %p29, %s31, %s20
      %p33 = scmp.ge.s32.totalorder %s32, 2
      %s34 = scalar_select %p33, 0, %s32
      %s35 = sadd.s32 1, %s19
      %s36 = scalar_select %p33, %s35, %s19
      %p37 = scmp.ge.s32.totalorder %s36, 1
      %s38 = scalar_select %p37, 0, %s36
      %s39 = ssub.s32 %s21, %s30
      %p40 = scmp.eq.s32.totalorder %s39, 0
      %s42 = sadd.s32 %s41, 1
      %s43 = scalar_select %p40, %s41, %s42
      %p46 = pneg %p40
      %p47 = scmp.eq.s32.totalorder %s12, 3
      %p48 = por %p46, %p47
      %p49 = scmp.ne.s32.totalorder %s41, %s44
      %p50 = scmp.eq.s32.totalorder %s12, 0
      %p51 = por %p49, %p50
      %p52 = scmp.ne.s32.totalorder %s41, %s44
      %p53 = scmp.eq.s32.totalorder %s17, 3
      %p54 = por %p52, %p53
      %p55 = scmp.ne.s32.totalorder %s44, %s45
      %p56 = scmp.eq.s32.totalorder %s17, 0
      %p57 = por %p55, %p56
      %p58 = scmp.ne.s32.totalorder %s44, %s45
      %p59 = scmp.eq.s32.totalorder %s18, 3
      %p60 = por %p58, %p59
      %p62 = scmp.ne.s32.totalorder %s45, %s61
      %p63 = scmp.eq.s32.totalorder %s18, 0
      %p64 = por %p62, %p63
      %s65 = ssub.s32 %s19, %s38
      %p66 = scmp.eq.s32.totalorder %s65, 0
      %s68 = sadd.s32 %s67, 1
      %s69 = scalar_select %p66, %s67, %s68
      %p72 = pneg %p66
      %p73 = scmp.eq.s32.totalorder %s12, 3
      %p74 = por %p72, %p73
      %p75 = scmp.ne.s32.totalorder %s67, %s70
      %p76 = scmp.eq.s32.totalorder %s12, 0
      %p77 = por %p75, %p76
      %p78 = scmp.ne.s32.totalorder %s67, %s70
      %p79 = scmp.eq.s32.totalorder %s17, 3
      %p80 = por %p78, %p79
      %p81 = scmp.ne.s32.totalorder %s70, %s71
      %p82 = scmp.eq.s32.totalorder %s17, 0
      %p83 = por %p81, %p82
      %p84 = scmp.ne.s32.totalorder %s70, %s71
      %p85 = scmp.eq.s32.totalorder %s18, 3
      %p86 = por %p84, %p85
      %p88 = scmp.ne.s32.totalorder %s71, %s87
      %p89 = scmp.eq.s32.totalorder %s18, 0
      %p90 = por %p88, %p89
      %s91 = ssub.s32 %s19, %s38
      %p92 = scmp.eq.s32.totalorder %s91, 0
      %s94 = sadd.s32 %s93, 1
      %s95 = scalar_select %p92, %s93, %s94
      %p98 = pneg %p92
      %p99 = scmp.eq.s32.totalorder %s12, 3
      %p100 = por %p98, %p99
      %p101 = scmp.ne.s32.totalorder %s93, %s96
      %p102 = scmp.eq.s32.totalorder %s12, 0
      %p103 = por %p101, %p102
      %p104 = scmp.ne.s32.totalorder %s93, %s96
      %p105 = scmp.eq.s32.totalorder %s17, 3
      %p106 = por %p104, %p105
      %p107 = scmp.ne.s32.totalorder %s96, %s97
      %p108 = scmp.eq.s32.totalorder %s17, 0
      %p109 = por %p107, %p108
      %p110 = scmp.ne.s32.totalorder %s96, %s97
      %p111 = scmp.eq.s32.totalorder %s18, 3
      %p112 = por %p110, %p111
      %p114 = scmp.ne.s32.totalorder %s97, %s113
      %p115 = scmp.eq.s32.totalorder %s18, 0
      %p116 = por %p114, %p115
      %s117 = smul.u32 %s20, %s21
      %s118 = smul.u32 %s34, %s30
      %s119 = ssub.s32 %s117, %s118
      %s120 = ssub.s32 %s19, %s38
      %s121 = sor.u32 %s119, %s120
      %p122 = scmp.eq.s32.totalorder %s121, 0
      %s124 = sadd.s32 %s123, 1
      %s125 = scalar_select %p122, %s123, %s124
      %p128 = pneg %p122
      %p129 = scmp.eq.s32.totalorder %s12, 3
      %p130 = por %p128, %p129
      %p131 = scmp.ne.s32.totalorder %s123, %s126
      %p132 = scmp.eq.s32.totalorder %s12, 0
      %p133 = por %p131, %p132
      %p134 = scmp.ne.s32.totalorder %s123, %s126
      %p135 = scmp.eq.s32.totalorder %s17, 3
      %p136 = por %p134, %p135
      %p137 = scmp.ne.s32.totalorder %s126, %s127
      %p138 = scmp.eq.s32.totalorder %s17, 0
      %p139 = por %p137, %p138
      %p140 = scmp.ne.s32.totalorder %s126, %s127
      %p141 = scmp.eq.s32.totalorder %s18, 3
      %p142 = por %p140, %p141
      %p144 = scmp.ne.s32.totalorder %s127, %s143
      %p145 = scmp.eq.s32.totalorder %s18, 0
      %p146 = por %p144, %p145
      %p147 = scmp.le.s32.totalorder 1, %s12
      %p148 = scmp.lt.s32.totalorder %s12, 5
      %p149 = pnand %p147, %p148
      %p150 = pneg %p149
      // Predicated region
      $region9: #{tpu_custom_call.1} parent=5 // pred_check
        _
      $region10: #{tpu_custom_call.1} parent=5 // pred_check_branch
        %152 = sbr.rel (%p149) target = $region12
      $region11: #{tpu_custom_call.1} parent=5 // pred_region
        %s153 = ssub.s32 %s12, 1
        // Predicated region
        $region13: #{tpu_custom_call.1} parent=11 // pred_check
          %p154 = pneg %p83
        $region14: #{tpu_custom_call.1} parent=11 // pred_check_branch
          %156 = sbr.rel (%p154) target = $region16
        $region15: #{tpu_custom_call.1} parent=11 // pred_region
          %p157 = scmp.lt.s32.totalorder %s22, 0
          %s158 = scalar_select %p157, %s22, 0
          %s159 = smul.addr %s158, 8
          %s160 = scalar_lea.vmem %s1, %s159
        $region16: #{tpu_custom_call.1} parent=11 // pred_fallthru
          _
        // Predicated region
        $region17: #{tpu_custom_call.1} parent=11 // pred_check
          %p161 = pneg %p109
        $region18: #{tpu_custom_call.1} parent=11 // pred_check_branch
          %163 = sbr.rel (%p161) target = $region20
        $region19: #{tpu_custom_call.1} parent=11 // pred_region
          %p164 = scmp.lt.s32.totalorder %s22, 0
          %s165 = scalar_select %p164, %s22, 0
          %s166 = smul.addr %s165, 8
          %s167 = scalar_lea.vmem %s2, %s166
        $region20: #{tpu_custom_call.1} parent=11 // pred_fallthru
          _
      $region12: #{tpu_custom_call.1} parent=5 // pred_fallthru
        _
      %p168 = scmp.lt.s32.totalorder %s12, 4
      // Predicated region
      $region21: #{tpu_custom_call.1} parent=5 // pred_check
        %p169 = pneg %p168
      $region22: #{tpu_custom_call.1} parent=5 // pred_check_branch
        %171 = sbr.rel (%p169) target = $region24
      $region23: #{tpu_custom_call.1} parent=5 // pred_region
        // Predicated region
        $region25: #{tpu_custom_call.1} parent=23 // pred_check
          %p172 = pneg %p51
        $region26: #{tpu_custom_call.1} parent=23 // pred_check_branch
          %174 = sbr.rel (%p172) target = $region28
        $region27: #{tpu_custom_call.1} parent=23 // pred_region
          %s175 = smul.u32 4, %s21
          %s176 = ssub.s32 6, %s175
          %p177 = scmp.lt.s32.totalorder %s176, 4
          %s178 = scalar_select %p177, %s176, 4
          %s179 = smul.u32 128, %s178
          %p180 = scmp.lt.s32.totalorder %s175, 5
          %s181 = scalar_select %p180, %s175, 5
          %s182 = smul.addr %s181, 8
          %s183 = scalar_lea.vmem %s0, %s182
          %s184 = smul.u32 4, %s21
          %s185 = ssub.s32 6, %s184
          %p186 = scmp.lt.s32.totalorder %s185, 4
          %s187 = scalar_select %p186, %s185, 4
          %s188 = smul.u32 128, %s187
        $region28: #{tpu_custom_call.1} parent=23 // pred_fallthru
          _
      $region24: #{tpu_custom_call.1} parent=5 // pred_fallthru
        _
      %p189 = scmp.le.s32.totalorder 1, %s12
      %p190 = scmp.lt.s32.totalorder %s12, 5
      %p191 = pnand %p189, %p190
      %p192 = pneg %p191
      // Predicated region
      $region29: #{tpu_custom_call.1} parent=5 // pred_check
        _
      $region30: #{tpu_custom_call.1} parent=5 // pred_check_branch
        %194 = sbr.rel (%p191) target = $region32
      $region31: #{tpu_custom_call.1} parent=5 // pred_region
        %s195 = ssub.s32 %s12, 1
        %s196 = smul.u32 4, %s24
        %s197 = ssub.s32 6, %s196
        %p198 = scmp.lt.s32.totalorder %s197, 4
        %s199 = scalar_select %p198, %s197, 4
        %s200 = smul.u32 128, %s199
        %p201 = scmp.lt.s32.totalorder %s196, 5
        %s202 = scalar_select %p201, %s196, 5
        %s203 = smul.addr %s202, 8
        %s204 = scalar_lea.vmem %s0, %s203
        %p205 = pneg %p57
        %p206 = pneg %p54
        %p207 = scmp.lt.s32.totalorder %s22, 0
        %s208 = scalar_select %p207, %s22, 0
        %s209 = smul.addr %s208, 8
        %s210 = scalar_lea.vmem %s1, %s209
        %p211 = pneg %p83
        %p212 = pneg %p80
        %p213 = scmp.lt.s32.totalorder %s22, 0
        %s214 = scalar_select %p213, %s22, 0
        %s215 = smul.addr %s214, 8
        %s216 = scalar_lea.vmem %s2, %s215
        %p217 = pneg %p109
        %p218 = pneg %p106
        %p219 = pneg %p139
        %p220 = pneg %p136
        %s221 = sand.u32 %s126, 1
        %s222 = scalar_lea.sflag [#allocation7], %s221
        %s223 = sand.u32 %s126, 1
        %s224 = smul.addr %s223, 32
        %s225 = scalar_lea.vmem [#allocation6], %s224
        %s226 = smul.u32 4, %s24
        %s227 = ssub.s32 6, %s226
        %p228 = scmp.lt.s32.totalorder %s227, 4
        %s229 = scalar_select %p228, %s227, 4
        %s230 = smul.u32 128, %s229
        %p231 = scmp.lt.s32.totalorder %s226, 5
        %s232 = scalar_select %p231, %s226, 5
        %s233 = smul.addr %s232, 8
        %s234 = scalar_lea.vmem %s0, %s233
        %s235 = smul.u32 4, %s24
        %s236 = ssub.s32 6, %s235
        %p237 = scmp.lt.s32.totalorder %s236, 4
        %s238 = scalar_select %p237, %s236, 4
        %s239 = smul.u32 128, %s238
        %p240 = scmp.lt.s32.totalorder %s22, 0
        %s241 = scalar_select %p240, %s22, 0
        %s242 = smul.addr %s241, 8
        %s243 = scalar_lea.vmem %s1, %s242
        %p244 = scmp.lt.s32.totalorder %s22, 0
        %s245 = scalar_select %p244, %s22, 0
        %s246 = smul.addr %s245, 8
        %s247 = scalar_lea.vmem %s2, %s246
        %s248 = smul.u32 %s23, %s24
        %s249 = smul.u32 4, %s248
        %s250 = ssub.s32 6, %s249
        %p251 = scmp.lt.s32.totalorder %s250, 4
        %s252 = scalar_select %p251, %s250, 4
        %s253 = smul.u32 128, %s252
        %v254 = vld [vmem:[%s234] sm:$0xff]
        %v255 = vld [vmem:[%s234 + $0x8] sm:$0xff]
        %v256 = vld [vmem:[%s234 + $0x10] sm:$0xff]
        %v257 = vld [vmem:[%s234 + $0x18] sm:$0xff]
        %v258 = vld [vmem:[%s243] sm:$0xff]
        %v259 = vld [vmem:[%s243 + $0x8] sm:$0xff]
        %v260 = vld [vmem:[%s243 + $0x10] sm:$0xff]
        %v261 = vld [vmem:[%s243 + $0x18] sm:$0xff]
        %vm262 = vcmask 261120
        %v264 = vsel %vm262, %v254, 0
        %v267 = vsel %vm262, %v255, 0
        %v270 = vsel %vm262, %v256, 0
        %v273 = vsel %vm262, %v257, 0
        %275 = vmatprep.subr.mxu0 0.0
        %276 = vmatpush1.msra.mxu0 0.0
        %277 = vmatprep.subr.mxu0 0.0
        %278 = vmatpush1.msra.mxu0 0.0
        %279 = vmatprep.subr.mxu0 0.0
        %280 = vmatpush1.msra.mxu0 0.0
        %281 = vmatprep.subr.mxu0 0.0
        %282 = vmatpush1.msra.mxu0 0.0
        %283 = vmatprep.subr.mxu0 0.0
        %284 = vmatpush1.msra.mxu0 0.0
        %285 = vmatprep.subr.mxu0 0.0
        %286 = vmatpush1.msra.mxu0 0.0
        %287 = vmatprep.subr.mxu0 0.0
        %288 = vmatpush1.msra.mxu0 0.0
        %289 = vmatprep.subr.mxu0 0.0
        %290 = vmatpush1.msra.mxu0 0.0
        %291 = vmatprep.subr.mxu0 0.0
        %292 = vmatpush1.msra.mxu0 0.0
        %293 = vmatprep.subr.mxu0 0.0
        %294 = vmatpush1.msra.mxu0 0.0
        %295 = vmatprep.subr.mxu0 0.0
        %296 = vmatpush1.msra.mxu0 0.0
        %297 = vmatprep.subr.mxu0 0.0
        %298 = vmatpush1.msra.mxu0 0.0
        %299 = vmatprep.subr.mxu0 0.0
        %300 = vmatpush1.msra.mxu0 %v261
        %301 = vmatprep.subr.mxu0 0.0
        %302 = vmatpush1.msra.mxu0 %v260
        %303 = vmatprep.subr.mxu0 0.0
        %304 = vmatpush1.msra.mxu0 %v259
        %305 = vmatprep.subr.mxu0 0.0
        %306 = vmatpush1.msra.mxu0 %v258
        %307 = vmatprep.subr.mxu0 0.0
        %308 = vmatpush2.msra.mxu0 0.0
        %309 = vmatprep.subr.mxu0 0.0
        %310 = vmatpush2.msra.mxu0 0.0
        %311 = vmatprep.subr.mxu0 0.0
        %312 = vmatpush2.msra.mxu0 0.0
        %313 = vmatprep.subr.mxu0 0.0
        %314 = vmatpush2.msra.mxu0 0.0
        %315 = vmatprep.subr.mxu0 0.0
        %316 = vmatpush2.msra.mxu0 0.0
        %317 = vmatprep.subr.mxu0 0.0
        %318 = vmatpush2.msra.mxu0 0.0
        %319 = vmatprep.subr.mxu0 0.0
        %320 = vmatpush2.msra.mxu0 0.0
        %321 = vmatprep.subr.mxu0 0.0
        %322 = vmatpush2.msra.mxu0 0.0
        %323 = vmatprep.subr.mxu0 0.0
        %324 = vmatpush2.msra.mxu0 0.0
        %325 = vmatprep.subr.mxu0 0.0
        %326 = vmatpush2.msra.mxu0 0.0
        %327 = vmatprep.subr.mxu0 0.0
        %328 = vmatpush2.msra.mxu0 0.0
        %329 = vmatprep.subr.mxu0 0.0
        %330 = vmatpush2.msra.mxu0 0.0
        %331 = vmatprep.subr.mxu0 0.0
        %332 = vmatpush2.msra.mxu0 0.0
        %333 = vmatprep.subr.mxu0 0.0
        %334 = vmatpush2.msra.mxu0 0.0
        %335 = vmatprep.subr.mxu0 0.0
        %336 = vmatpush2.msra.mxu0 0.0
        %337 = vmatprep.subr.mxu0 0.0
        %338 = vmatpush2.msra.mxu0 0.0
        %339 = vmatprep.mubr.f32.mxu0 0.0
        %340 = vmatmul.mubr.f32.gmra.mxu0 %v264
        %v341 = vpop.f32.mrf.mxu0
        %v342 = vadd.f32 0.0, %v341
        %v343 = vpop.f32.mrf.mxu0
        %344 = vmatprep.mubr.f32.mxu0 0.0
        %345 = vmatmul.mubr.f32.gmra.mxu0 %v267
        %v346 = vpop.f32.mrf.mxu0
        %v347 = vadd.f32 0.0, %v346
        %v348 = vpop.f32.mrf.mxu0
        %349 = vmatprep.mubr.f32.mxu0 0.0
        %350 = vmatmul.mubr.f32.gmra.mxu0 %v270
        %v351 = vpop.f32.mrf.mxu0
        %v352 = vadd.f32 0.0, %v351
        %v353 = vpop.f32.mrf.mxu0
        %354 = vmatprep.mubr.f32.mxu0 0.0
        %355 = vmatmul.mubr.f32.gmra.mxu0 %v273
        %v356 = vpop.f32.mrf.mxu0
        %v357 = vadd.f32 0.0, %v356
        %v358 = vpop.f32.mrf.mxu0
        %359 = vdwg.mxu0
        %p360 = scmp.eq.s32.totalorder %s23, 0
        // Predicated region
        $region33: #{tpu_custom_call.1} parent=31 // pred_check
          %p361 = pneg %p360
        $region34: #{tpu_custom_call.1} parent=31 // pred_check_branch
          %363 = sbr.rel (%p361) target = $region36
        $region35: #{tpu_custom_call.1} parent=31 // pred_region
          %p364 = scmp.eq.s32.totalorder %s24, 0
          // Predicated region
          $region37: #{tpu_custom_call.1} parent=35 // pred_check
            %p365 = pneg %p364
          $region38: #{tpu_custom_call.1} parent=35 // pred_check_branch
            %367 = sbr.rel (%p365) target = $region40
          $region39: #{tpu_custom_call.1} parent=35 // pred_region
            %368 = vst [vmem:[#allocation2] sm:$0x1] 0.0
            %369 = vst [vmem:[#allocation3] sm:$0x1] 0.0
          $region40: #{tpu_custom_call.1} parent=35 // pred_fallthru
            _
          %s370 = smul.u32 %s24, 32
          %v371 = vlaneseq
          %v372 = vshrl.u32 %v371, 7
          %v373 = vadd.s32 %v372, 8
          %v374 = vadd.s32 %v372, 16
          %v375 = vadd.s32 %v372, 24
          %v376 = vstv %s370
          %v377 = vadd.s32 %v376, %v372
          %v378 = vadd.s32 %v376, %v373
          %v379 = vadd.s32 %v376, %v374
          %v380 = vadd.s32 %v376, %v375
          %vm381 = vcmp.lt.s32.totalorder %v377, 48
          %vm382 = vcmp.lt.s32.totalorder %v378, 48
          %vm383 = vcmp.lt.s32.totalorder %v379, 48
          %vm384 = vcmp.lt.s32.totalorder %v380, 48
          %v385 = vsel %vm381, %v342, 0.0
          %v386 = vsel %vm382, %v347, 0.0
          %v387 = vsel %vm383, %v352, 0.0
          %v388 = vsel %vm384, %v357, 0.0
          %v389 = vld [vmem:[#allocation2] sm:$0x1]
          %v390 = vadd.f32 %v385, %v386
          %v391 = vadd.f32 %v390, %v387
          %v392 = vadd.f32 %v391, %v388
          %v393 = vrot.slane %v392, 4
          %v394 = vadd.f32 %v392, %v393
          %v395 = vrot.slane %v394, 2
          %v396 = vadd.f32 %v394, %v395
          %v397 = vrot.slane %v396, 1
          %v398 = vadd.f32 %v396, %v397
          %v399 = vadd.f32 %v389, %v398
          %400 = vst [vmem:[#allocation2] sm:$0x1] %v399
          %v401 = vld [vmem:[#allocation3] sm:$0x1]
          %v402 = vmul.f32 %v385, %v385
          %v403 = vmul.f32 %v386, %v386
          %v404 = vmul.f32 %v387, %v387
          %v405 = vmul.f32 %v388, %v388
          %v406 = vadd.f32 %v402, %v403
          %v407 = vadd.f32 %v406, %v404
          %v408 = vadd.f32 %v407, %v405
          %v409 = vrot.slane %v408, 4
          %v410 = vadd.f32 %v408, %v409
          %v411 = vrot.slane %v410, 2
          %v412 = vadd.f32 %v410, %v411
          %v413 = vrot.slane %v412, 1
          %v414 = vadd.f32 %v412, %v413
          %v415 = vadd.f32 %v401, %v414
          %416 = vst [vmem:[#allocation3] sm:$0x1] %v415
        $region36: #{tpu_custom_call.1} parent=31 // pred_fallthru
          _
        %p417 = scmp.eq.s32.totalorder %s23, 1
        // Predicated region
        $region41: #{tpu_custom_call.1} parent=31 // pred_check
          %p418 = pneg %p417
        $region42: #{tpu_custom_call.1} parent=31 // pred_check_branch
          %420 = sbr.rel (%p418) target = $region44
        $region43: #{tpu_custom_call.1} parent=31 // pred_region
          %p421 = scmp.eq.s32.totalorder %s24, 0
          // Predicated region
          $region45: #{tpu_custom_call.1} parent=43 // pred_check
            %p422 = pneg %p421
          $region46: #{tpu_custom_call.1} parent=43 // pred_check_branch
            %424 = sbr.rel (%p422) target = $region48
          $region47: #{tpu_custom_call.1} parent=43 // pred_region
            %v425 = vld [vmem:[#allocation2] sm:$0x1]
            %v426 = vmul.f32 %v425, 0.020833334
            %v427 = vld [vmem:[#allocation3] sm:$0x1]
            %v428 = vmul.f32 %v427, 0.020833334
            %v429 = vmul.f32 %v426, %v426
            %v430 = vsub.f32 %v428, %v429
            %v431 = vmax.f32 %v430, 0.0
            %v432 = vld [vmem:[%s247] sm:$0x1]
            %v433 = vld [vmem:[%s247 + $0x1] sm:$0x1]
            %v434 = vadd.f32 %v431, 1e-05
            %v435 = vrsqrt.pop %v434
            %v436 = vmul.f32 %v432, %v435
            %437 = vst [vmem:[#allocation4] sm:$0x1] %v436
            %v438 = vmul.f32 %v426, %v436
            %v439 = vsub.f32 %v433, %v438
            %440 = vst [vmem:[#allocation5] sm:$0x1] %v439
          $region48: #{tpu_custom_call.1} parent=43 // pred_fallthru
            _
          %v441 = vld [vmem:[#allocation4] sm:$0x1]
          %v443 = vlaneseq
          %v444 = vshrl.u32 %v443, 7
          %v445 = vsub.s32 0, %v444
          %v446 = vrot.slane %v441, %v445
          %v448 = vmul.f32 %v342, %v446
          %v449 = vmul.f32 %v347, %v446
          %v450 = vmul.f32 %v352, %v446
          %v451 = vmul.f32 %v357, %v446
          %v452 = vld [vmem:[#allocation5] sm:$0x1]
          %v454 = vlaneseq
          %v455 = vshrl.u32 %v454, 7
          %v456 = vsub.s32 0, %v455
          %v457 = vrot.slane %v452, %v456
          %v459 = vadd.f32 %v448, %v457
          %v460 = vadd.f32 %v449, %v457
          %v461 = vadd.f32 %v450, %v457
          %v462 = vadd.f32 %v451, %v457
          %v463 = vmul.f32 %v459, 0.5
          %v464 = vmul.f32 %v460, 0.5
          %v465 = vmul.f32 %v461, 0.5
          %v466 = vmul.f32 %v462, 0.5
          %v467 = vmul.f32 %v459, 0.70710677
          %v468 = vmul.f32 %v460, 0.70710677
          %v469 = vmul.f32 %v461, 0.70710677
          %v470 = vmul.f32 %v462, 0.70710677
          %v471 = verf.f32.pop %v467
          %v472 = verf.f32.pop %v468
          %v473 = verf.f32.pop %v469
          %v474 = verf.f32.pop %v470
          %v475 = vadd.f32 %v471, 1.0
          %v476 = vadd.f32 %v472, 1.0
          %v477 = vadd.f32 %v473, 1.0
          %v478 = vadd.f32 %v474, 1.0
          %v479 = vmul.f32 %v463, %v475
          %v480 = vmul.f32 %v464, %v476
          %v481 = vmul.f32 %v465, %v477
          %v482 = vmul.f32 %v466, %v478
          %483 = vst [vmem:[%s225] sm:$0xff] %v479
          %484 = vst [vmem:[%s225 + $0x8] sm:$0xff] %v480
          %485 = vst [vmem:[%s225 + $0x10] sm:$0xff] %v481
          %486 = vst [vmem:[%s225 + $0x18] sm:$0xff] %v482
        $region44: #{tpu_custom_call.1} parent=31 // pred_fallthru
          _
        %s487 = sand.u32 %s126, 1
        %s488 = scalar_lea.sflag [#allocation7], %s487
        %s489 = sand.u32 %s126, 1
        %s490 = smul.addr %s489, 32
        %s491 = scalar_lea.vmem [#allocation6], %s490
        // Predicated region
        $region49: #{tpu_custom_call.1} parent=31 // pred_check
          %p492 = pneg %p136
        $region50: #{tpu_custom_call.1} parent=31 // pred_check_branch
          %494 = sbr.rel (%p492) target = $region52
        $region51: #{tpu_custom_call.1} parent=31 // pred_region
          %s495 = smul.u32 %s23, %s24
          %s496 = smul.u32 4, %s495
          %s497 = ssub.s32 6, %s496
          %p498 = scmp.lt.s32.totalorder %s497, 4
          %s499 = scalar_select %p498, %s497, 4
          %s500 = smul.u32 128, %s499
          %s502 = ssub.s32 512, %s500
          %503 = vsyncadd %s488, %s502
          %p504 = scmp.ne.s32.totalorder 0, %s500
          %s505 = sadd.s32 %s22, %s496
          %s506 = smul.addr %s505, 128
          %s507 = scalar_lea.hbm %s3, %s506
          %s508 = smul.u32 8, %s499
          %s509 = sshll.u32 %s491, 4
          %s510 = int_to_ptr.vmem [resolvable:$true] %s509
          %s511 = sshll.u32 %s508, 4
          %515 = dma.vmem_to_hbm [thread:$0]  (%p504), %s510, %s511, %s507, %s488, 128, 128, 8
        $region52: #{tpu_custom_call.1} parent=31 // pred_fallthru
          _
      $region32: #{tpu_custom_call.1} parent=5 // pred_fallthru
        _
      %p516 = scmp.le.s32.totalorder 2, %s12
      // Predicated region
      $region53: #{tpu_custom_call.1} parent=5 // pred_check
        %p517 = pneg %p516
      $region54: #{tpu_custom_call.1} parent=5 // pred_check_branch
        %519 = sbr.rel (%p517) target = $region56
      $region55: #{tpu_custom_call.1} parent=5 // pred_region
        %s520 = ssub.s32 %s12, 2
        // Predicated region
        $region57: #{tpu_custom_call.1} parent=55 // pred_check
          %p521 = pneg %p142
        $region58: #{tpu_custom_call.1} parent=55 // pred_check_branch
          %523 = sbr.rel (%p521) target = $region60
        $region59: #{tpu_custom_call.1} parent=55 // pred_region
          %s524 = sand.u32 %s127, 1
          %s525 = scalar_lea.sflag [#allocation7], %s524
          %s526 = sand.u32 %s127, 1
          %s527 = smul.addr %s526, 32
          %s528 = scalar_lea.vmem [#allocation6], %s527
          %529 = dma.done %s525, 512
        $region60: #{tpu_custom_call.1} parent=55 // pred_fallthru
          _
      $region56: #{tpu_custom_call.1} parent=5 // pred_fallthru
        _
    $region6: #{tpu_custom_call.1} parent=1 // loop_footer
      %s16 = sadd.s32 1, %s12
    $region7: #{tpu_custom_call.1} parent=1 // loop_footer_branch
      %11 = sbr.rel target = $region3
    $region8: #{tpu_custom_call.1} parent=1 // loop_exit
      _
    %530 = vsyncpa [#allocation7], 1
    %s531 = scalar_lea.sflag [#allocation7], 1
    %532 = vsyncpa %s531, 1

// kernel: tpu_custom_call.1
$region0: #{tpu_custom_call.1}
  #allocation0 [shape = 'u32[]', space=smem, size = 0x4, offset = 0x4, fixed_abs, tag = 'smem constant byte address 0x4 - core index']
  #allocation1 [shape = 'u32[144,128]{1,0:T(1,128)}', space=vmem, size = 0x12000, scoped, tag = 'internal scratch']
  #allocation2 [shape = 'f32[1,128]{1,0:T(1,128)}', space=vmem, size = 0x200, scoped, tag = 'scratch operand']
  #allocation3 [shape = 'f32[1,128]{1,0:T(1,128)}', space=vmem, size = 0x200, scoped, tag = 'scratch operand']
  #allocation4 [shape = 'f32[1,128]{1,0:T(1,128)}', space=vmem, size = 0x200, scoped, tag = 'scratch operand']
  #allocation5 [shape = 'f32[1,128]{1,0:T(1,128)}', space=vmem, size = 0x200, scoped, tag = 'scratch operand']
  %s0 = inlined_call_operand.vmem [shape: f32[48,32], index: 0, kind: input, shape index: {}]
  %s1 = inlined_call_operand.vmem [shape: f32[32,128], index: 1, kind: input, shape index: {}]
  %s2 = inlined_call_operand.vmem [shape: f32[8,128], index: 2, kind: input, shape index: {}]
  %s3 = inlined_call_operand.hbm [shape: f32[48,128], index: 3, kind: output, shape index: {}]
  %s4 = sld [smem:[#allocation0]]
  $region61: #{tpu_custom_call.1} parent=0
    _
  %s6 = ssub.s32 1, %s4
  %s7 = scalar_select 0, %s6, %s4
  $region1: #{tpu_custom_call.1} parent=0
    #allocation6 [shape = 'u8[32768]{0}', space=vmem, size = 0x8000, scoped, tag = 'output window, operand 0']
    #allocation7 [shape = 's32[2]{0}', space=sflag, size = 0x8, scoped, tag = 'scoped memory for tpu_custom_call.1']
    %8 = vsyncpa [#allocation7], 0
    %s9 = scalar_lea.sflag [#allocation7], 1
    %10 = vsyncpa %s9, 0
    loop: start=0, step=1, limit=6
    $region2: #{tpu_custom_call.1} parent=1 // loop_pre_header
      _
    $region3: #{tpu_custom_call.1} parent=1 // loop_header
      %s12 = sphi 0, %s16
      %p13 = scmp.ge.s32.totalorder %s12, 6
      %s19 = sphi 0, %s38
      %s20 = sphi 0, %s34
      %s21 = sphi 0, %s30
      %s22 = sphi 0, %s19
      %s23 = sphi 0, %s20
      %s24 = sphi 0, %s21
      %s25 = sphi 0, %s22
      %s26 = sphi 0, %s23
      %s27 = sphi 0, %s24
      %s41 = sphi 0, %s43
      %s44 = sphi 0, %s41
      %s45 = sphi 0, %s44
      %s61 = sphi 0, %s45
      %s67 = sphi 0, %s69
      %s70 = sphi 0, %s67
      %s71 = sphi 0, %s70
      %s87 = sphi 0, %s71
      %s93 = sphi 0, %s95
      %s96 = sphi 0, %s93
      %s97 = sphi 0, %s96
      %s113 = sphi 0, %s97
      %s123 = sphi 0, %s125
      %s126 = sphi 0, %s123
      %s127 = sphi 0, %s126
      %s143 = sphi 0, %s127
    $region4: #{tpu_custom_call.1} parent=1 // loop_header_branch
      %15 = sbr.rel (%p13) target = $region8
    $region5: #{tpu_custom_call.1} parent=1 // loop_body
      %s17 = ssub.s32 %s12, 1
      %s18 = ssub.s32 %s12, 2
      %s28 = sadd.s32 1, %s21
      %p29 = scmp.ge.s32.totalorder %s28, 2
      %s30 = scalar_select %p29, 0, %s28
      %s31 = sadd.s32 1, %s20
      %s32 = scalar_select %p29, %s31, %s20
      %p33 = scmp.ge.s32.totalorder %s32, 2
      %s34 = scalar_select %p33, 0, %s32
      %s35 = sadd.s32 1, %s19
      %s36 = scalar_select %p33, %s35, %s19
      %p37 = scmp.ge.s32.totalorder %s36, 1
      %s38 = scalar_select %p37, 0, %s36
      %s39 = ssub.s32 %s21, %s30
      %p40 = scmp.eq.s32.totalorder %s39, 0
      %s42 = sadd.s32 %s41, 1
      %s43 = scalar_select %p40, %s41, %s42
      %p46 = pneg %p40
      %p47 = scmp.eq.s32.totalorder %s12, 3
      %p48 = por %p46, %p47
      %p49 = scmp.ne.s32.totalorder %s41, %s44
      %p50 = scmp.eq.s32.totalorder %s12, 0
      %p51 = por %p49, %p50
      %p52 = scmp.ne.s32.totalorder %s41, %s44
      %p53 = scmp.eq.s32.totalorder %s17, 3
      %p54 = por %p52, %p53
      %p55 = scmp.ne.s32.totalorder %s44, %s45
      %p56 = scmp.eq.s32.totalorder %s17, 0
      %p57 = por %p55, %p56
      %p58 = scmp.ne.s32.totalorder %s44, %s45
      %p59 = scmp.eq.s32.totalorder %s18, 3
      %p60 = por %p58, %p59
      %p62 = scmp.ne.s32.totalorder %s45, %s61
      %p63 = scmp.eq.s32.totalorder %s18, 0
      %p64 = por %p62, %p63
      %s65 = ssub.s32 %s19, %s38
      %p66 = scmp.eq.s32.totalorder %s65, 0
      %s68 = sadd.s32 %s67, 1
      %s69 = scalar_select %p66, %s67, %s68
      %p72 = pneg %p66
      %p73 = scmp.eq.s32.totalorder %s12, 3
      %p74 = por %p72, %p73
      %p75 = scmp.ne.s32.totalorder %s67, %s70
      %p76 = scmp.eq.s32.totalorder %s12, 0
      %p77 = por %p75, %p76
      %p78 = scmp.ne.s32.totalorder %s67, %s70
      %p79 = scmp.eq.s32.totalorder %s17, 3
      %p80 = por %p78, %p79
      %p81 = scmp.ne.s32.totalorder %s70, %s71
      %p82 = scmp.eq.s32.totalorder %s17, 0
      %p83 = por %p81, %p82
      %p84 = scmp.ne.s32.totalorder %s70, %s71
      %p85 = scmp.eq.s32.totalorder %s18, 3
      %p86 = por %p84, %p85
      %p88 = scmp.ne.s32.totalorder %s71, %s87
      %p89 = scmp.eq.s32.totalorder %s18, 0
      %p90 = por %p88, %p89
      %s91 = ssub.s32 %s19, %s38
      %p92 = scmp.eq.s32.totalorder %s91, 0
      %s94 = sadd.s32 %s93, 1
      %s95 = scalar_select %p92, %s93, %s94
      %p98 = pneg %p92
      %p99 = scmp.eq.s32.totalorder %s12, 3
      %p100 = por %p98, %p99
      %p101 = scmp.ne.s32.totalorder %s93, %s96
      %p102 = scmp.eq.s32.totalorder %s12, 0
      %p103 = por %p101, %p102
      %p104 = scmp.ne.s32.totalorder %s93, %s96
      %p105 = scmp.eq.s32.totalorder %s17, 3
      %p106 = por %p104, %p105
      %p107 = scmp.ne.s32.totalorder %s96, %s97
      %p108 = scmp.eq.s32.totalorder %s17, 0
      %p109 = por %p107, %p108
      %p110 = scmp.ne.s32.totalorder %s96, %s97
      %p111 = scmp.eq.s32.totalorder %s18, 3
      %p112 = por %p110, %p111
      %p114 = scmp.ne.s32.totalorder %s97, %s113
      %p115 = scmp.eq.s32.totalorder %s18, 0
      %p116 = por %p114, %p115
      %s117 = smul.u32 %s20, %s21
      %s118 = smul.u32 %s34, %s30
      %s119 = ssub.s32 %s117, %s118
      %s120 = ssub.s32 %s19, %s38
      %s121 = sor.u32 %s119, %s120
      %p122 = scmp.eq.s32.totalorder %s121, 0
      %s124 = sadd.s32 %s123, 1
      %s125 = scalar_select %p122, %s123, %s124
      %p128 = pneg %p122
      %p129 = scmp.eq.s32.totalorder %s12, 3
      %p130 = por %p128, %p129
      %p131 = scmp.ne.s32.totalorder %s123, %s126
      %p132 = scmp.eq.s32.totalorder %s12, 0
      %p133 = por %p131, %p132
      %p134 = scmp.ne.s32.totalorder %s123, %s126
      %p135 = scmp.eq.s32.totalorder %s17, 3
      %p136 = por %p134, %p135
      %p137 = scmp.ne.s32.totalorder %s126, %s127
      %p138 = scmp.eq.s32.totalorder %s17, 0
      %p139 = por %p137, %p138
      %p140 = scmp.ne.s32.totalorder %s126, %s127
      %p141 = scmp.eq.s32.totalorder %s18, 3
      %p142 = por %p140, %p141
      %p144 = scmp.ne.s32.totalorder %s127, %s143
      %p145 = scmp.eq.s32.totalorder %s18, 0
      %p146 = por %p144, %p145
      %p147 = scmp.le.s32.totalorder 1, %s12
      %p148 = scmp.lt.s32.totalorder %s12, 5
      %p149 = pnand %p147, %p148
      %p150 = pneg %p149
      // Predicated region
      $region9: #{tpu_custom_call.1} parent=5 // pred_check
        _
      $region10: #{tpu_custom_call.1} parent=5 // pred_check_branch
        %152 = sbr.rel (%p149) target = $region12
      $region11: #{tpu_custom_call.1} parent=5 // pred_region
        %s153 = ssub.s32 %s12, 1
        // Predicated region
        $region13: #{tpu_custom_call.1} parent=11 // pred_check
          %p154 = pneg %p83
        $region14: #{tpu_custom_call.1} parent=11 // pred_check_branch
          %156 = sbr.rel (%p154) target = $region16
        $region15: #{tpu_custom_call.1} parent=11 // pred_region
          %p157 = scmp.lt.s32.totalorder %s22, 0
          %s158 = scalar_select %p157, %s22, 0
          %s159 = smul.addr %s158, 8
          %s160 = scalar_lea.vmem %s1, %s159
        $region16: #{tpu_custom_call.1} parent=11 // pred_fallthru
          _
        // Predicated region
        $region17: #{tpu_custom_call.1} parent=11 // pred_check
          %p161 = pneg %p109
        $region18: #{tpu_custom_call.1} parent=11 // pred_check_branch
          %163 = sbr.rel (%p161) target = $region20
        $region19: #{tpu_custom_call.1} parent=11 // pred_region
          %p164 = scmp.lt.s32.totalorder %s22, 0
          %s165 = scalar_select %p164, %s22, 0
          %s166 = smul.addr %s165, 8
          %s167 = scalar_lea.vmem %s2, %s166
        $region20: #{tpu_custom_call.1} parent=11 // pred_fallthru
          _
      $region12: #{tpu_custom_call.1} parent=5 // pred_fallthru
        _
      %p168 = scmp.lt.s32.totalorder %s12, 4
      // Predicated region
      $region21: #{tpu_custom_call.1} parent=5 // pred_check
        %p169 = pneg %p168
      $region22: #{tpu_custom_call.1} parent=5 // pred_check_branch
        %171 = sbr.rel (%p169) target = $region24
      $region23: #{tpu_custom_call.1} parent=5 // pred_region
        // Predicated region
        $region25: #{tpu_custom_call.1} parent=23 // pred_check
          %p172 = pneg %p51
        $region26: #{tpu_custom_call.1} parent=23 // pred_check_branch
          %174 = sbr.rel (%p172) target = $region28
        $region27: #{tpu_custom_call.1} parent=23 // pred_region
          %s175 = smul.u32 4, %s21
          %s176 = ssub.s32 6, %s175
          %p177 = scmp.lt.s32.totalorder %s176, 4
          %s178 = scalar_select %p177, %s176, 4
          %s179 = smul.u32 128, %s178
          %p180 = scmp.lt.s32.totalorder %s175, 5
          %s181 = scalar_select %p180, %s175, 5
          %s182 = smul.addr %s181, 8
          %s183 = scalar_lea.vmem %s0, %s182
          %s184 = smul.u32 4, %s21
          %s185 = ssub.s32 6, %s184
          %p186 = scmp.lt.s32.totalorder %s185, 4
          %s187 = scalar_select %p186, %s185, 4
          %s188 = smul.u32 128, %s187
        $region28: #{tpu_custom_call.1} parent=23 // pred_fallthru
          _
      $region24: #{tpu_custom_call.1} parent=5 // pred_fallthru
        _
      %p189 = scmp.le.s32.totalorder 1, %s12
      %p190 = scmp.lt.s32.totalorder %s12, 5
      %p191 = pnand %p189, %p190
      %p192 = pneg %p191
      // Predicated region
      $region29: #{tpu_custom_call.1} parent=5 // pred_check
        _
      $region30: #{tpu_custom_call.1} parent=5 // pred_check_branch
        %194 = sbr.rel (%p191) target = $region32
      $region31: #{tpu_custom_call.1} parent=5 // pred_region
        %s195 = ssub.s32 %s12, 1
        %s196 = smul.u32 4, %s24
        %s197 = ssub.s32 6, %s196
        %p198 = scmp.lt.s32.totalorder %s197, 4
        %s199 = scalar_select %p198, %s197, 4
        %s200 = smul.u32 128, %s199
        %p201 = scmp.lt.s32.totalorder %s196, 5
        %s202 = scalar_select %p201, %s196, 5
        %s203 = smul.addr %s202, 8
        %s204 = scalar_lea.vmem %s0, %s203
        %p205 = pneg %p57
        %p206 = pneg %p54
        %p207 = scmp.lt.s32.totalorder %s22, 0
        %s208 = scalar_select %p207, %s22, 0
        %s209 = smul.addr %s208, 8
        %s210 = scalar_lea.vmem %s1, %s209
        %p211 = pneg %p83
        %p212 = pneg %p80
        %p213 = scmp.lt.s32.totalorder %s22, 0
        %s214 = scalar_select %p213, %s22, 0
        %s215 = smul.addr %s214, 8
        %s216 = scalar_lea.vmem %s2, %s215
        %p217 = pneg %p109
        %p218 = pneg %p106
        %p219 = pneg %p139
        %p220 = pneg %p136
        %s221 = sand.u32 %s126, 1
        %s222 = scalar_lea.sflag [#allocation7], %s221
        %s223 = sand.u32 %s126, 1
        %s224 = smul.addr %s223, 32
        %s225 = scalar_lea.vmem [#allocation6], %s224
        %s226 = smul.u32 4, %s24
        %s227 = ssub.s32 6, %s226
        %p228 = scmp.lt.s32.totalorder %s227, 4
        %s229 = scalar_select %p228, %s227, 4
        %s230 = smul.u32 128, %s229
        %p231 = scmp.lt.s32.totalorder %s226, 5
        %s232 = scalar_select %p231, %s226, 5
        %s233 = smul.addr %s232, 8
        %s234 = scalar_lea.vmem %s0, %s233
        %s235 = smul.u32 4, %s24
        %s236 = ssub.s32 6, %s235
        %p237 = scmp.lt.s32.totalorder %s236, 4
        %s238 = scalar_select %p237, %s236, 4
        %s239 = smul.u32 128, %s238
        %p240 = scmp.lt.s32.totalorder %s22, 0
        %s241 = scalar_select %p240, %s22, 0
        %s242 = smul.addr %s241, 8
        %s243 = scalar_lea.vmem %s1, %s242
        %p244 = scmp.lt.s32.totalorder %s22, 0
        %s245 = scalar_select %p244, %s22, 0
        %s246 = smul.addr %s245, 8
        %s247 = scalar_lea.vmem %s2, %s246
        %s248 = smul.u32 %s23, %s24
        %s249 = smul.u32 4, %s248
        %s250 = ssub.s32 6, %s249
        %p251 = scmp.lt.s32.totalorder %s250, 4
        %s252 = scalar_select %p251, %s250, 4
        %s253 = smul.u32 128, %s252
        %v254 = vld [vmem:[%s234] sm:$0xff]
        %v255 = vld [vmem:[%s234 + $0x8] sm:$0xff]
        %v256 = vld [vmem:[%s234 + $0x10] sm:$0xff]
        %v257 = vld [vmem:[%s234 + $0x18] sm:$0xff]
        %v258 = vld [vmem:[%s243] sm:$0xff]
        %v259 = vld [vmem:[%s243 + $0x8] sm:$0xff]
        %v260 = vld [vmem:[%s243 + $0x10] sm:$0xff]
        %v261 = vld [vmem:[%s243 + $0x18] sm:$0xff]
        %vm262 = vcmask 261120
        %v264 = vsel %vm262, %v254, 0
        %v267 = vsel %vm262, %v255, 0
        %v270 = vsel %vm262, %v256, 0
        %v273 = vsel %vm262, %v257, 0
        %275 = vmatprep.subr.mxu0 0.0
        %276 = vmatpush1.msra.mxu0 0.0
        %277 = vmatprep.subr.mxu0 0.0
        %278 = vmatpush1.msra.mxu0 0.0
        %279 = vmatprep.subr.mxu0 0.0
        %280 = vmatpush1.msra.mxu0 0.0
        %281 = vmatprep.subr.mxu0 0.0
        %282 = vmatpush1.msra.mxu0 0.0
        %283 = vmatprep.subr.mxu0 0.0
        %284 = vmatpush1.msra.mxu0 0.0
        %285 = vmatprep.subr.mxu0 0.0
        %286 = vmatpush1.msra.mxu0 0.0
        %287 = vmatprep.subr.mxu0 0.0
        %288 = vmatpush1.msra.mxu0 0.0
        %289 = vmatprep.subr.mxu0 0.0
        %290 = vmatpush1.msra.mxu0 0.0
        %291 = vmatprep.subr.mxu0 0.0
        %292 = vmatpush1.msra.mxu0 0.0
        %293 = vmatprep.subr.mxu0 0.0
        %294 = vmatpush1.msra.mxu0 0.0
        %295 = vmatprep.subr.mxu0 0.0
        %296 = vmatpush1.msra.mxu0 0.0
        %297 = vmatprep.subr.mxu0 0.0
        %298 = vmatpush1.msra.mxu0 0.0
        %299 = vmatprep.subr.mxu0 0.0
        %300 = vmatpush1.msra.mxu0 %v261
        %301 = vmatprep.subr.mxu0 0.0
        %302 = vmatpush1.msra.mxu0 %v260
        %303 = vmatprep.subr.mxu0 0.0
        %304 = vmatpush1.msra.mxu0 %v259
        %305 = vmatprep.subr.mxu0 0.0
        %306 = vmatpush1.msra.mxu0 %v258
        %307 = vmatprep.subr.mxu0 0.0
        %308 = vmatpush2.msra.mxu0 0.0
        %309 = vmatprep.subr.mxu0 0.0
        %310 = vmatpush2.msra.mxu0 0.0
        %311 = vmatprep.subr.mxu0 0.0
        %312 = vmatpush2.msra.mxu0 0.0
        %313 = vmatprep.subr.mxu0 0.0
        %314 = vmatpush2.msra.mxu0 0.0
        %315 = vmatprep.subr.mxu0 0.0
        %316 = vmatpush2.msra.mxu0 0.0
        %317 = vmatprep.subr.mxu0 0.0
        %318 = vmatpush2.msra.mxu0 0.0
        %319 = vmatprep.subr.mxu0 0.0
        %320 = vmatpush2.msra.mxu0 0.0
        %321 = vmatprep.subr.mxu0 0.0
        %322 = vmatpush2.msra.mxu0 0.0
        %323 = vmatprep.subr.mxu0 0.0
        %324 = vmatpush2.msra.mxu0 0.0
        %325 = vmatprep.subr.mxu0 0.0
        %326 = vmatpush2.msra.mxu0 0.0
        %327 = vmatprep.subr.mxu0 0.0
        %328 = vmatpush2.msra.mxu0 0.0
        %329 = vmatprep.subr.mxu0 0.0
        %330 = vmatpush2.msra.mxu0 0.0
        %331 = vmatprep.subr.mxu0 0.0
        %332 = vmatpush2.msra.mxu0 0.0
        %333 = vmatprep.subr.mxu0 0.0
        %334 = vmatpush2.msra.mxu0 0.0
        %335 = vmatprep.subr.mxu0 0.0
        %336 = vmatpush2.msra.mxu0 0.0
        %337 = vmatprep.subr.mxu0 0.0
        %338 = vmatpush2.msra.mxu0 0.0
        %339 = vmatprep.mubr.f32.mxu0 0.0
        %340 = vmatmul.mubr.f32.gmra.mxu0 %v264
        %v341 = vpop.f32.mrf.mxu0
        %v342 = vadd.f32 0.0, %v341
        %v343 = vpop.f32.mrf.mxu0
        %344 = vmatprep.mubr.f32.mxu0 0.0
        %345 = vmatmul.mubr.f32.gmra.mxu0 %v267
        %v346 = vpop.f32.mrf.mxu0
        %v347 = vadd.f32 0.0, %v346
        %v348 = vpop.f32.mrf.mxu0
        %349 = vmatprep.mubr.f32.mxu0 0.0
        %350 = vmatmul.mubr.f32.gmra.mxu0 %v270
        %v351 = vpop.f32.mrf.mxu0
        %v352 = vadd.f32 0.0, %v351
        %v353 = vpop.f32.mrf.mxu0
        %354 = vmatprep.mubr.f32.mxu0 0.0
        %355 = vmatmul.mubr.f32.gmra.mxu0 %v273
        %v356 = vpop.f32.mrf.mxu0
        %v357 = vadd.f32 0.0, %v356
        %v358 = vpop.f32.mrf.mxu0
        %359 = vdwg.mxu0
        %p360 = scmp.eq.s32.totalorder %s23, 0
        // Predicated region
        $region33: #{tpu_custom_call.1} parent=31 // pred_check
          %p361 = pneg %p360
        $region34: #{tpu_custom_call.1} parent=31 // pred_check_branch
          %363 = sbr.rel (%p361) target = $region36
        $region35: #{tpu_custom_call.1} parent=31 // pred_region
          %p364 = scmp.eq.s32.totalorder %s24, 0
          // Predicated region
          $region37: #{tpu_custom_call.1} parent=35 // pred_check
            %p365 = pneg %p364
          $region38: #{tpu_custom_call.1} parent=35 // pred_check_branch
            %367 = sbr.rel (%p365) target = $region40
          $region39: #{tpu_custom_call.1} parent=35 // pred_region
            %368 = vst [vmem:[#allocation2] sm:$0x1] 0.0
            %369 = vst [vmem:[#allocation3] sm:$0x1] 0.0
          $region40: #{tpu_custom_call.1} parent=35 // pred_fallthru
            _
          %s370 = smul.u32 %s24, 32
          %v371 = vlaneseq
          %v372 = vshrl.u32 %v371, 7
          %v373 = vadd.s32 %v372, 8
          %v374 = vadd.s32 %v372, 16
          %v375 = vadd.s32 %v372, 24
          %v376 = vstv %s370
          %v377 = vadd.s32 %v376, %v372
          %v378 = vadd.s32 %v376, %v373
          %v379 = vadd.s32 %v376, %v374
          %v380 = vadd.s32 %v376, %v375
          %vm381 = vcmp.lt.s32.totalorder %v377, 48
          %vm382 = vcmp.lt.s32.totalorder %v378, 48
          %vm383 = vcmp.lt.s32.totalorder %v379, 48
          %vm384 = vcmp.lt.s32.totalorder %v380, 48
          %v385 = vsel %vm381, %v342, 0.0
          %v386 = vsel %vm382, %v347, 0.0
          %v387 = vsel %vm383, %v352, 0.0
          %v388 = vsel %vm384, %v357, 0.0
          %v389 = vld [vmem:[#allocation2] sm:$0x1]
          %v390 = vadd.f32 %v385, %v386
          %v391 = vadd.f32 %v390, %v387
          %v392 = vadd.f32 %v391, %v388
          %v393 = vrot.slane %v392, 4
          %v394 = vadd.f32 %v392, %v393
          %v395 = vrot.slane %v394, 2
          %v396 = vadd.f32 %v394, %v395
          %v397 = vrot.slane %v396, 1
          %v398 = vadd.f32 %v396, %v397
          %v399 = vadd.f32 %v389, %v398
          %400 = vst [vmem:[#allocation2] sm:$0x1] %v399
          %v401 = vld [vmem:[#allocation3] sm:$0x1]
          %v402 = vmul.f32 %v385, %v385
          %v403 = vmul.f32 %v386, %v386
          %v404 = vmul.f32 %v387, %v387
          %v405 = vmul.f32 %v388, %v388
          %v406 = vadd.f32 %v402, %v403
          %v407 = vadd.f32 %v406, %v404
          %v408 = vadd.f32 %v407, %v405
          %v409 = vrot.slane %v408, 4
          %v410 = vadd.f32 %v408, %v409
          %v411 = vrot.slane %v410, 2
          %v412 = vadd.f32 %v410, %v411
          %v413 = vrot.slane %v412, 1
          %v414 = vadd.f32 %v412, %v413
          %v415 = vadd.f32 %v401, %v414
          %416 = vst [vmem:[#allocation3] sm:$0x1] %v415
        $region36: #{tpu_custom_call.1} parent=31 // pred_fallthru
          _
        %p417 = scmp.eq.s32.totalorder %s23, 1
        // Predicated region
        $region41: #{tpu_custom_call.1} parent=31 // pred_check
          %p418 = pneg %p417
        $region42: #{tpu_custom_call.1} parent=31 // pred_check_branch
          %420 = sbr.rel (%p418) target = $region44
        $region43: #{tpu_custom_call.1} parent=31 // pred_region
          %p421 = scmp.eq.s32.totalorder %s24, 0
          // Predicated region
          $region45: #{tpu_custom_call.1} parent=43 // pred_check
            %p422 = pneg %p421
          $region46: #{tpu_custom_call.1} parent=43 // pred_check_branch
            %424 = sbr.rel (%p422) target = $region48
          $region47: #{tpu_custom_call.1} parent=43 // pred_region
            %v425 = vld [vmem:[#allocation2] sm:$0x1]
            %v426 = vmul.f32 %v425, 0.020833334
            %v427 = vld [vmem:[#allocation3] sm:$0x1]
            %v428 = vmul.f32 %v427, 0.020833334
            %v429 = vmul.f32 %v426, %v426
            %v430 = vsub.f32 %v428, %v429
            %v431 = vmax.f32 %v430, 0.0
            %v432 = vld [vmem:[%s247] sm:$0x1]
            %v433 = vld [vmem:[%s247 + $0x1] sm:$0x1]
            %v434 = vadd.f32 %v431, 1e-05
            %v435 = vrsqrt.pop %v434
            %v436 = vmul.f32 %v432, %v435
            %437 = vst [vmem:[#allocation4] sm:$0x1] %v436
            %v438 = vmul.f32 %v426, %v436
            %v439 = vsub.f32 %v433, %v438
            %440 = vst [vmem:[#allocation5] sm:$0x1] %v439
          $region48: #{tpu_custom_call.1} parent=43 // pred_fallthru
            _
          %v441 = vld [vmem:[#allocation4] sm:$0x1]
          %v443 = vlaneseq
          %v444 = vshrl.u32 %v443, 7
          %v445 = vsub.s32 0, %v444
          %v446 = vrot.slane %v441, %v445
          %v448 = vmul.f32 %v342, %v446
          %v449 = vmul.f32 %v347, %v446
          %v450 = vmul.f32 %v352, %v446
          %v451 = vmul.f32 %v357, %v446
          %v452 = vld [vmem:[#allocation5] sm:$0x1]
          %v454 = vlaneseq
          %v455 = vshrl.u32 %v454, 7
          %v456 = vsub.s32 0, %v455
          %v457 = vrot.slane %v452, %v456
          %v459 = vadd.f32 %v448, %v457
          %v460 = vadd.f32 %v449, %v457
          %v461 = vadd.f32 %v450, %v457
          %v462 = vadd.f32 %v451, %v457
          %v463 = vmul.f32 %v459, 0.5
          %v464 = vmul.f32 %v460, 0.5
          %v465 = vmul.f32 %v461, 0.5
          %v466 = vmul.f32 %v462, 0.5
          %v467 = vmul.f32 %v459, 0.70710677
          %v468 = vmul.f32 %v460, 0.70710677
          %v469 = vmul.f32 %v461, 0.70710677
          %v470 = vmul.f32 %v462, 0.70710677
          %v471 = verf.f32.pop %v467
          %v472 = verf.f32.pop %v468
          %v473 = verf.f32.pop %v469
          %v474 = verf.f32.pop %v470
          %v475 = vadd.f32 %v471, 1.0
          %v476 = vadd.f32 %v472, 1.0
          %v477 = vadd.f32 %v473, 1.0
          %v478 = vadd.f32 %v474, 1.0
          %v479 = vmul.f32 %v463, %v475
          %v480 = vmul.f32 %v464, %v476
          %v481 = vmul.f32 %v465, %v477
          %v482 = vmul.f32 %v466, %v478
          %483 = vst [vmem:[%s225] sm:$0xff] %v479
          %484 = vst [vmem:[%s225 + $0x8] sm:$0xff] %v480
          %485 = vst [vmem:[%s225 + $0x10] sm:$0xff] %v481
          %486 = vst [vmem:[%s225 + $0x18] sm:$0xff] %v482
        $region44: #{tpu_custom_call.1} parent=31 // pred_fallthru
          _
        %s487 = sand.u32 %s126, 1
        %s488 = scalar_lea.sflag [#allocation7], %s487
        %s489 = sand.u32 %s126, 1
        %s490 = smul.addr %s489, 32
        %s491 = scalar_lea.vmem [#allocation6], %s490
        // Predicated region
        $region49: #{tpu_custom_call.1} parent=31 // pred_check
          %p492 = pneg %p136
        $region50: #{tpu_custom_call.1} parent=31 // pred_check_branch
          %494 = sbr.rel (%p492) target = $region52
        $region51: #{tpu_custom_call.1} parent=31 // pred_region
          %s495 = smul.u32 %s23, %s24
          %s496 = smul.u32 4, %s495
          %s497 = ssub.s32 6, %s496
          %p498 = scmp.lt.s32.totalorder %s497, 4
          %s499 = scalar_select %p498, %s497, 4
          %s500 = smul.u32 128, %s499
          %s502 = ssub.s32 512, %s500
          %503 = vsyncadd %s488, %s502
          %p504 = scmp.ne.s32.totalorder 0, %s500
          %s505 = sadd.s32 %s22, %s496
          %s506 = smul.addr %s505, 128
          %s507 = scalar_lea.hbm %s3, %s506
          %s508 = smul.u32 8, %s499
          %s509 = sshll.u32 %s491, 4
          %s510 = int_to_ptr.vmem [resolvable:$true] %s509
          %s511 = sshll.u32 %s508, 4
          %515 = dma.vmem_to_hbm [thread:$0]  (%p504), %s510, %s511, %s507, %s488, 128, 128, 8
        $region52: #{tpu_custom_call.1} parent=31 // pred_fallthru
          _
      $region32: #{tpu_custom_call.1} parent=5 // pred_fallthru
        _
      %p516 = scmp.le.s32.totalorder 2, %s12
      // Predicated region
      $region53: #{tpu_custom_call.1} parent=5 // pred_check
        %p517 = pneg %p516
      $region54: #{tpu_custom_call.1} parent=5 // pred_check_branch
        %519 = sbr.rel (%p517) target = $region56
      $region55: #{tpu_custom_call.1} parent=5 // pred_region
        %s520 = ssub.s32 %s12, 2
        // Predicated region
        $region57: #{tpu_custom_call.1} parent=55 // pred_check
          %p521 = pneg %p142
        $region58: #{tpu_custom_call.1} parent=55 // pred_check_branch
          %523 = sbr.rel (%p521) target = $region60
        $region59: #{tpu_custom_call.1} parent=55 // pred_region
          %s524 = sand.u32 %s127, 1
          %s525 = scalar_lea.sflag [#allocation7], %s524
          %s526 = sand.u32 %s127, 1
          %s527 = smul.addr %s526, 32
          %s528 = scalar_lea.vmem [#allocation6], %s527
          %529 = dma.done %s525, 512
        $region60: #{tpu_custom_call.1} parent=55 // pred_fallthru
          _
      $region56: #{tpu_custom_call.1} parent=5 // pred_fallthru
        _
    $region6: #{tpu_custom_call.1} parent=1 // loop_footer
      %s16 = sadd.s32 1, %s12
    $region7: #{tpu_custom_call.1} parent=1 // loop_footer_branch
      %11 = sbr.rel target = $region3
    $region8: #{tpu_custom_call.1} parent=1 // loop_exit
      _
    %530 = vsyncpa [#allocation7], 1
    %s531 = scalar_lea.sflag [#allocation7], 1
    %532 = vsyncpa %s531, 1

</llo_original>
